<compile_context>
chip_gen: v7x
topology: tpu7x:2x2x1
jax: 0.10.0
libtpu: 0.0.40
codegen_flags: <defaults>
</compile_context>

<pallas_src>
import jax
import jax.numpy as jnp
from jax.experimental import pallas as pl
from jax.experimental.pallas import tpu as pltpu

_LANE = 128
_NEG_INF = -1e30  # finite "minus infinity" for masked softmax lanes


def _round_up(x, m):
    return (x + m - 1) // m * m


# --------------------------------------------------------------------------
# Kernel
# --------------------------------------------------------------------------
def graph_aggregator_kernel(
    x_ref,      # (TILE_N, C_in)           VMEM  f32    node-feature tile
    wsg_ref,    # (C_in, 2*C_out_pad)      VMEM  bf16   [w1 | w_gate] fused
    bsg_ref,    # (1, 2*C_out_pad)         VMEM  f32    [b1 | b_gate(-inf pad)]
    w2_ref,     # (C_out_pad, C_hid_pad)   VMEM  bf16   mlp_final[0] weight
    b2_ref,     # (1, C_hid_pad)           VMEM  f32    mlp_final[0] bias
    w3_ref,     # (C_hid_pad, C_out)       VMEM  bf16   mlp_final[2] weight
    b3_ref,     # (1, C_out)               VMEM  f32    mlp_final[2] bias
    a_ref,      # (1, 1)                   SMEM  f32    PReLU slope
    o_ref,      # (TILE_N, C_out)          VMEM  f32    output tile
):
    c_out_pad = wsg_ref.shape[1] // 2

    # bf16 cast happens in-kernel (no wrapper pre-pass / extra HBM traffic)
    x = x_ref[...].astype(wsg_ref.dtype)

    # --- stage 1: fused [mlp Linear | mlp_gate Linear] on the MXU ---
    hg = jnp.dot(x, wsg_ref[...], preferred_element_type=jnp.float32)
    hg = hg + bsg_ref[...]
    h = hg[:, :c_out_pad]          # states branch (f32); pad lanes = 0
    g = hg[:, c_out_pad:]          # gate logits  (f32); pad lanes = -1e30

    # PReLU (single shared slope)
    a = a_ref[0, 0]
    h = jnp.where(h >= 0.0, h, a * h)

    # softmax over the feature axis (dim=1); pad lanes contribute exp(-huge)=0
    g = g - jnp.max(g, axis=1, keepdims=True)
    e = jnp.exp(g)
    g = e * pl.reciprocal(jnp.sum(e, axis=1, keepdims=True), approx=True)

    # gated combine
    s = (h * g).astype(w2_ref.dtype)   # bf16 for the next MXU gemm

    # --- stage 2: mlp_final = Linear + LeakyReLU(0.01) + Linear ---
    u = jnp.dot(s, w2_ref[...], preferred_element_type=jnp.float32) + b2_ref[...]
    u = jnp.where(u >= 0.0, u, 0.01 * u)
    u = u.astype(w3_ref.dtype)

    y = jnp.dot(u, w3_ref[...], preferred_element_type=jnp.float32) + b3_ref[...]
    o_ref[...] = y.astype(o_ref.dtype)


# --------------------------------------------------------------------------
# Wrapper
# --------------------------------------------------------------------------
def graph_aggregator(x, prep, *, tile_n=4096):
    """x: (N, in_channels) float32.  prep: output of prepare_params()."""
    n, c_in = x.shape
    assert c_in == prep["c_in"], "input feature width mismatch"

    co_pad = prep["wsg"].shape[1] // 2     # padded intermediate C_out (128)
    ch_pad = prep["w2"].shape[1]           # padded C_hid (128)
    c_out = prep["w3"].shape[1]            # true C_out (32)

    # node tile: multiple of 16, no larger than needed
    tile = min(_round_up(tile_n, 16), _round_up(n, 16))
    if tile >= _round_up(n, 16) and n > 16:
        # split so a v7x megacore (2 TensorCores) gets >= 2 grid steps
        tile = _round_up(pl.cdiv(n, 2), 16)
    grid = (pl.cdiv(n, tile),)             # partial last block handled by Pallas

    # VMEM budget: 2x-buffered x/out blocks + f32 intermediates + weights
    vmem_bytes = (
        2 * tile * c_in * 4
        + 2 * tile * c_out * 4
        + 3 * tile * (2 * co_pad) * 4
        + 2 * 1024 * 1024
    )
    vmem_limit = min(max(vmem_bytes, 32 * 1024 * 1024), 64 * 1024 * 1024)

    # advisory cost estimate (reflects 64-lane input / 32-lane output traffic)
    flops = 2 * n * (c_in * 2 * co_pad + co_pad * ch_pad + ch_pad * c_out)
    bytes_accessed = (
        n * c_in * 4 + n * c_out * 4
        + (prep["wsg"].size + prep["w2"].size + prep["w3"].size) * 2
        + (prep["bsg"].size + prep["b2"].size + prep["b3"].size) * 4
    )
    cost = pl.CostEstimate(
        flops=flops, transcendentals=n * co_pad, bytes_accessed=bytes_accessed
    )

    out = pl.pallas_call(
        graph_aggregator_kernel,
        out_shape=jax.ShapeDtypeStruct((n, c_out), jnp.float32),
        grid=grid,
        in_specs=[
            pl.BlockSpec((tile, c_in), lambda i: (i, 0)),        # x tile (pipelined)
            pl.BlockSpec((c_in, 2 * co_pad), lambda i: (0, 0)),  # fused w1|wg (resident)
            pl.BlockSpec((1, 2 * co_pad), lambda i: (0, 0)),     # fused b1|bg
            pl.BlockSpec((co_pad, ch_pad), lambda i: (0, 0)),    # w2
            pl.BlockSpec((1, ch_pad), lambda i: (0, 0)),         # b2
            pl.BlockSpec((ch_pad, c_out), lambda i: (0, 0)),     # w3 (true 32 cols)
            pl.BlockSpec((1, c_out), lambda i: (0, 0)),          # b3
            pl.BlockSpec(memory_space=pltpu.MemorySpace.SMEM),   # PReLU scalar
        ],
        out_specs=pl.BlockSpec((tile, c_out), lambda i: (i, 0)),
        compiler_params=pltpu.CompilerParams(
            dimension_semantics=("parallel",),
            vmem_limit_bytes=vmem_limit,
        ),
        cost_estimate=cost,
    )(
        x,
        prep["wsg"], prep["bsg"],
        prep["w2"], prep["b2"],
        prep["w3"], prep["b3"],
        prep["prelu_a"],
    )

    return out  # already exactly (N, out_channels) -- no post-kernel slice


# --------------------------------------------------------------------------
# Parameter construction / preparation
# --------------------------------------------------------------------------
def init_params(key, in_channels, hidden_channels, out_channels):
    """Deterministic synthetic params (torch Linear-style init).
    Weights stored as (in_features, out_features) = W^T, float32, unpadded."""
    ks = jax.random.split(key, 8)

    def lin(kw, kb, fan_in, fan_out):
        bound = 1.0 / jnp.sqrt(fan_in)
        w = jax.random.uniform(kw, (fan_in, fan_out), jnp.float32, -bound, bound)
        b = jax.random.uniform(kb, (1, fan_out), jnp.float32, -bound, bound)
        return w, b

    w1, b1 = lin(ks[0], ks[1], in_channels, out_channels)      # mlp Linear
    wg, bg = lin(ks[2], ks[3], in_channels, out_channels)      # mlp_gate Linear
    w2, b2 = lin(ks[4], ks[5], out_channels, hidden_channels)  # mlp_final[0]
    w3, b3 = lin(ks[6], ks[7], hidden_channels, out_channels)  # mlp_final[2]

    return {
        "w1": w1, "b1": b1,
        "wg": wg, "bg": bg,
        "w2": w2, "b2": b2,
        "w3": w3, "b3": b3,
        "prelu_a": jnp.full((1, 1), 0.25, jnp.float32),  # torch PReLU default
    }


def prepare_params(p):
    """Fuse w1/wg, pad only the intermediate feature dims to 128 lanes,
    keep in_features (64) and final out_features (32) at their true sizes,
    cast weights to bf16."""
    c_in, c_out = p["w1"].shape
    c_hid = p["w2"].shape[1]
    co = _round_up(c_out, _LANE)   # padded intermediate width (128)
    ch = _round_up(c_hid, _LANE)   # padded hidden width (128)

    def pad2(a, rows, cols, fill=0.0):
        return jnp.pad(
            a, ((0, rows - a.shape[0]), (0, cols - a.shape[1])),
            constant_values=fill,
        )

    # fused [w1 | wg]: in-features stay at the true 64 (no lane pad on x)
    wsg = jnp.concatenate(
        [pad2(p["w1"], c_in, co), pad2(p["wg"], c_in, co)], axis=1
    ).astype(jnp.bfloat16)
    bsg = jnp.concatenate(
        [pad2(p["b1"], 1, co), pad2(p["bg"], 1, co, fill=_NEG_INF)], axis=1
    ).astype(jnp.float32)

    return {
        "wsg": wsg, "bsg": bsg,
        "w2": pad2(p["w2"], co, ch).astype(jnp.bfloat16),
        "b2": pad2(p["b2"], 1, ch).astype(jnp.float32),
        # final Linear keeps its true 32 output columns -> (N, 32) kernel output
        "w3": pad2(p["w3"], ch, c_out).astype(jnp.bfloat16),
        "b3": p["b3"].astype(jnp.float32),
        "prelu_a": p["prelu_a"].astype(jnp.float32),
        "c_in": c_in, "c_out": c_out,
    }


# --------------------------------------------------------------------------
# Pure-JAX reference (mirrors the PyTorch GraphAggregator.forward, full f32)
# --------------------------------------------------------------------------
def graph_aggregator_ref(x, p):
    h = x @ p["w1"] + p["b1"]
    a = p["prelu_a"][0, 0]
    h = jnp.where(h >= 0.0, h, a * h)
    g = jax.nn.softmax(x @ p["wg"] + p["bg"], axis=1)
    s = h * g
    u = s @ p["w2"] + p["b2"]
    u = jnp.where(u >= 0.0, u, 0.01 * u)
    return u @ p["w3"] + p["b3"]


# TODO(synk): GEmbedLayer / GATConv message passing, scatter_mean pooling and
# the classification MLP are data-dependent graph gather/scatter / downstream
# ops and are not part of this kernel; only GraphAggregator.forward (the dense
# per-node part of GENGAT) is fused here.

if __name__ == "__main__":
    # GENGAT's aggregator config: in=64, hidden=48, out=32
    in_channels, hidden_channels, out_channels = 64, 48, 32
    N = 200  # number of graph nodes (not a tile multiple -> exercises the
             # partial last grid block / dropped OOB writes)

    key = jax.random.PRNGKey(0)
    kx, kp = jax.random.split(key)
    x = jax.random.normal(kx, (N, in_channels), jnp.float32)
    params = init_params(kp, in_channels, hidden_channels, out_channels)
    prep = prepare_params(params)

    # small tile so this demo actually runs a multi-step pipelined grid;
    # production default is tile_n=4096 (see graph_aggregator signature).
    out = graph_aggregator(x, prep, tile_n=128)
    out = jax.block_until_ready(out)

    ref = graph_aggregator_ref(x, params)
    assert out.shape == (N, out_channels)
    max_err = float(jnp.max(jnp.abs(out - ref)))
    # bf16 MXU inputs + approx reciprocal => loosened tolerance vs f32 reference
    assert jnp.allclose(out, ref, atol=2e-2, rtol=2e-2), (
        f"mismatch vs JAX reference (max abs err {max_err})"
    )

    print("KERNEL_OK")
</pallas_src>

<mosaic_0001>
module attributes {stable_mosaic.version = 11 : i64} {
  func.func @graph_aggregator_kernel(%arg0: i32, %arg1: memref<128x64xf32, #tpu.memory_space<vmem>>, %arg2: memref<64x256xbf16, #tpu.memory_space<vmem>>, %arg3: memref<1x256xf32, #tpu.memory_space<vmem>>, %arg4: memref<128x128xbf16, #tpu.memory_space<vmem>>, %arg5: memref<1x128xf32, #tpu.memory_space<vmem>>, %arg6: memref<128x32xbf16, #tpu.memory_space<vmem>>, %arg7: memref<1x32xf32, #tpu.memory_space<vmem>>, %arg8: memref<1x1xf32, #tpu.memory_space<smem>>, %arg9: memref<128x32xf32, #tpu.memory_space<vmem>>) attributes {dimension_semantics = [#tpu.dimension_semantics<parallel>], iteration_bounds = array<i64: 2>, scalar_prefetch = 0 : i64, scratch_operands = 0 : i64, tpu.core_type = #tpu.core_type<tc>, window_params = [{transform_indices = @transform_0, window_bounds = array<i64: 128, 64>}, {pipeline_mode = #tpu.pipeline_mode<synchronous>, transform_indices = @transform_1, window_bounds = array<i64: 64, 256>}, {pipeline_mode = #tpu.pipeline_mode<synchronous>, transform_indices = @transform_2, window_bounds = array<i64: 1, 256>}, {pipeline_mode = #tpu.pipeline_mode<synchronous>, transform_indices = @transform_3, window_bounds = array<i64: 128, 128>}, {pipeline_mode = #tpu.pipeline_mode<synchronous>, transform_indices = @transform_4, window_bounds = array<i64: 1, 128>}, {pipeline_mode = #tpu.pipeline_mode<synchronous>, transform_indices = @transform_5, window_bounds = array<i64: 128, 32>}, {pipeline_mode = #tpu.pipeline_mode<synchronous>, transform_indices = @transform_6, window_bounds = array<i64: 1, 32>}, {transform_indices = @transform_7, window_bounds = array<i64: 1, 1>}, {transform_indices = @transform_8, window_bounds = array<i64: 128, 32>}]} {
    %c0 = arith.constant 0 : index
    %c0_0 = arith.constant 0 : index
    %0 = vector.load %arg1[%c0, %c0_0] : memref<128x64xf32, #tpu.memory_space<vmem>>, vector<128x64xf32>
    %1 = arith.truncf %0 : vector<128x64xf32> to vector<128x64xbf16>
    %c0_1 = arith.constant 0 : index
    %c0_2 = arith.constant 0 : index
    %2 = vector.load %arg2[%c0_1, %c0_2] : memref<64x256xbf16, #tpu.memory_space<vmem>>, vector<64x256xbf16>
    %cst = arith.constant dense<0.000000e+00> : vector<128x256xf32>
    %3 = tpu.matmul %1, %2, %cst {dimension_numbers = #tpu.dot_dimension_numbers<[1], [0], [0], [1], [0, 0, 1, 1], [], []>} : vector<128x64xbf16>, vector<64x256xbf16>, vector<128x256xf32> -> vector<128x256xf32>
    %c0_3 = arith.constant 0 : index
    %c0_4 = arith.constant 0 : index
    %4 = vector.load %arg3[%c0_3, %c0_4] : memref<1x256xf32, #tpu.memory_space<vmem>>, vector<1x256xf32>
    %5 = vector.broadcast %4 : vector<1x256xf32> to vector<128x256xf32>
    %6 = arith.addf %3, %5 : vector<128x256xf32>
    %7 = vector.extract_strided_slice %6 {offsets = [0, 0], sizes = [128, 128], strides = [1, 1]} : vector<128x256xf32> to vector<128x128xf32>
    %8 = vector.extract_strided_slice %6 {offsets = [0, 128], sizes = [128, 128], strides = [1, 1]} : vector<128x256xf32> to vector<128x128xf32>
    %c0_5 = arith.constant 0 : index
    %c0_6 = arith.constant 0 : index
    %9 = memref.load %arg8[%c0_5, %c0_6] : memref<1x1xf32, #tpu.memory_space<smem>>
    %cst_7 = arith.constant 0.000000e+00 : f32
    %10 = vector.broadcast %cst_7 : f32 to vector<128x128xf32>
    %11 = arith.cmpf oge, %7, %10 : vector<128x128xf32>
    %12 = vector.broadcast %9 : f32 to vector<128x128xf32>
    %13 = arith.mulf %12, %7 : vector<128x128xf32>
    %14 = arith.select %11, %7, %13 : vector<128x128xi1>, vector<128x128xf32>
    %cst_8 = arith.constant dense<0xFF800000> : vector<128xf32>
    %15 = vector.multi_reduction <maximumf>, %8, %cst_8 [1] : vector<128x128xf32> to vector<128xf32>
    %16 = vector.shape_cast %15 : vector<128xf32> to vector<128x1xf32>
    %17 = vector.broadcast %16 : vector<128x1xf32> to vector<128x128xf32>
    %18 = arith.subf %8, %17 : vector<128x128xf32>
    %19 = math.exp %18 : vector<128x128xf32>
    %cst_9 = arith.constant dense<0.000000e+00> : vector<128xf32>
    %20 = vector.multi_reduction <add>, %19, %cst_9 [1] : vector<128x128xf32> to vector<128xf32>
    %21 = vector.shape_cast %20 : vector<128xf32> to vector<128x1xf32>
    %22 = tpu.reciprocal %21 {approx = true} : vector<128x1xf32> -> vector<128x1xf32>
    %23 = vector.broadcast %22 : vector<128x1xf32> to vector<128x128xf32>
    %24 = arith.mulf %19, %23 : vector<128x128xf32>
    %25 = arith.mulf %14, %24 : vector<128x128xf32>
    %26 = arith.truncf %25 : vector<128x128xf32> to vector<128x128xbf16>
    %c0_10 = arith.constant 0 : index
    %c0_11 = arith.constant 0 : index
    %27 = vector.load %arg4[%c0_10, %c0_11] : memref<128x128xbf16, #tpu.memory_space<vmem>>, vector<128x128xbf16>
    %cst_12 = arith.constant dense<0.000000e+00> : vector<128x128xf32>
    %28 = tpu.matmul %26, %27, %cst_12 {dimension_numbers = #tpu.dot_dimension_numbers<[1], [0], [0], [1], [0, 0, 1, 1], [], []>} : vector<128x128xbf16>, vector<128x128xbf16>, vector<128x128xf32> -> vector<128x128xf32>
    %c0_13 = arith.constant 0 : index
    %c0_14 = arith.constant 0 : index
    %29 = vector.load %arg5[%c0_13, %c0_14] : memref<1x128xf32, #tpu.memory_space<vmem>>, vector<1x128xf32>
    %30 = vector.broadcast %29 : vector<1x128xf32> to vector<128x128xf32>
    %31 = arith.addf %28, %30 : vector<128x128xf32>
    %cst_15 = arith.constant 0.000000e+00 : f32
    %32 = vector.broadcast %cst_15 : f32 to vector<128x128xf32>
    %33 = arith.cmpf oge, %31, %32 : vector<128x128xf32>
    %cst_16 = arith.constant 0.00999999977 : f32
    %34 = vector.broadcast %cst_16 : f32 to vector<128x128xf32>
    %35 = arith.mulf %34, %31 : vector<128x128xf32>
    %36 = arith.select %33, %31, %35 : vector<128x128xi1>, vector<128x128xf32>
    %37 = arith.truncf %36 : vector<128x128xf32> to vector<128x128xbf16>
    %c0_17 = arith.constant 0 : index
    %c0_18 = arith.constant 0 : index
    %38 = vector.load %arg6[%c0_17, %c0_18] : memref<128x32xbf16, #tpu.memory_space<vmem>>, vector<128x32xbf16>
    %cst_19 = arith.constant dense<0.000000e+00> : vector<128x32xf32>
    %39 = tpu.matmul %37, %38, %cst_19 {dimension_numbers = #tpu.dot_dimension_numbers<[1], [0], [0], [1], [0, 0, 1, 1], [], []>} : vector<128x128xbf16>, vector<128x32xbf16>, vector<128x32xf32> -> vector<128x32xf32>
    %c0_20 = arith.constant 0 : index
    %c0_21 = arith.constant 0 : index
    %40 = vector.load %arg7[%c0_20, %c0_21] : memref<1x32xf32, #tpu.memory_space<vmem>>, vector<1x32xf32>
    %41 = vector.broadcast %40 : vector<1x32xf32> to vector<128x32xf32>
    %42 = arith.addf %39, %41 : vector<128x32xf32>
    %c0_22 = arith.constant 0 : index
    %c0_23 = arith.constant 0 : index
    %43 = vector.load %arg9[%c0_22, %c0_23] : memref<128x32xf32, #tpu.memory_space<vmem>>, vector<128x32xf32>
    tpu.vector_store %arg9[%c0_22, %c0_23], %42 {strides = array<i32>} : memref<128x32xf32, #tpu.memory_space<vmem>>, vector<128x32xf32>,
    return
  }
  func.func @transform_0(%arg0: i32) -> (i32, i32) {
    %c0_i32 = arith.constant 0 : i32
    %c0_i32_0 = arith.constant 0 : i32
    return %arg0, %c0_i32 : i32, i32
  }
  func.func @transform_1(%arg0: i32) -> (i32, i32) {
    %c0_i32 = arith.constant 0 : i32
    %c0_i32_0 = arith.constant 0 : i32
    %c0_i32_1 = arith.constant 0 : i32
    return %c0_i32, %c0_i32_0 : i32, i32
  }
  func.func @transform_2(%arg0: i32) -> (i32, i32) {
    %c0_i32 = arith.constant 0 : i32
    %c0_i32_0 = arith.constant 0 : i32
    %c0_i32_1 = arith.constant 0 : i32
    return %c0_i32, %c0_i32_0 : i32, i32
  }
  func.func @transform_3(%arg0: i32) -> (i32, i32) {
    %c0_i32 = arith.constant 0 : i32
    %c0_i32_0 = arith.constant 0 : i32
    %c0_i32_1 = arith.constant 0 : i32
    return %c0_i32, %c0_i32_0 : i32, i32
  }
  func.func @transform_4(%arg0: i32) -> (i32, i32) {
    %c0_i32 = arith.constant 0 : i32
    %c0_i32_0 = arith.constant 0 : i32
    %c0_i32_1 = arith.constant 0 : i32
    return %c0_i32, %c0_i32_0 : i32, i32
  }
  func.func @transform_5(%arg0: i32) -> (i32, i32) {
    %c0_i32 = arith.constant 0 : i32
    %c0_i32_0 = arith.constant 0 : i32
    %c0_i32_1 = arith.constant 0 : i32
    return %c0_i32, %c0_i32_0 : i32, i32
  }
  func.func @transform_6(%arg0: i32) -> (i32, i32) {
    %c0_i32 = arith.constant 0 : i32
    %c0_i32_0 = arith.constant 0 : i32
    %c0_i32_1 = arith.constant 0 : i32
    return %c0_i32, %c0_i32_0 : i32, i32
  }
  func.func @transform_7(%arg0: i32) -> (i32, i32) {
    %c0_i32 = arith.constant 0 : i32
    %c0_i32_0 = arith.constant 0 : i32
    %c0_i32_1 = arith.constant 0 : i32
    return %c0_i32, %c0_i32_0 : i32, i32
  }
  func.func @transform_8(%arg0: i32) -> (i32, i32) {
    %c0_i32 = arith.constant 0 : i32
    %c0_i32_0 = arith.constant 0 : i32
    return %arg0, %c0_i32 : i32, i32
  }
}

</mosaic_0001>

<llo_original>
// kernel: tpu_custom_call.1
$region0: #{tpu_custom_call.1}
  #allocation0 [shape = 'u32[]', space=smem, size = 0x4, offset = 0x4, fixed_abs, tag = 'smem constant byte address 0x4 - core index']
  #allocation1 [shape = 'u32[144,128]{1,0:T(1,128)}', space=vmem, size = 0x12000, scoped, tag = 'internal scratch']
  #allocation2 [shape = 'f32[1,1]{1,0:T(1,128)S(6)}', space=smem, size = 0x200, scoped, tag = 'scoped memory for tpu_custom_call.1']
  %s0 = inlined_call_operand.vmem [shape: f32[200,64], index: 0, kind: input, shape index: {}]
  %s1 = inlined_call_operand.vmem [shape: bf16[64,256], index: 1, kind: input, shape index: {}]
  %s2 = inlined_call_operand.vmem [shape: f32[1,256], index: 2, kind: input, shape index: {}]
  %s3 = inlined_call_operand.vmem [shape: bf16[128,128], index: 3, kind: input, shape index: {}]
  %s4 = inlined_call_operand.vmem [shape: f32[1,128], index: 4, kind: input, shape index: {}]
  %s5 = inlined_call_operand.vmem [shape: bf16[128,32], index: 5, kind: input, shape index: {}]
  %s6 = inlined_call_operand.vmem [shape: f32[1,32], index: 6, kind: input, shape index: {}]
  %s7 = inlined_call_operand.<no memory space> [shape: f32[1,1], index: 7, kind: input, shape index: {}]
  %s8 = inlined_call_operand.vmem [shape: f32[200,32], index: 8, kind: output, shape index: {}]
  %s9 = sld [smem:[#allocation0]]
  $region113: #{tpu_custom_call.1} parent=0
    _
  %s11 = ssub.s32 1, %s9
  %s12 = scalar_select 0, %s11, %s9
  %13 = sst [smem:[#allocation2]] %s7
  $region1: #{tpu_custom_call.1} parent=0
    #allocation3 [shape = 'u8[131072]{0}', space=vmem, size = 0x20000, scoped, tag = 'output window, operand 0']
    loop: start=0, step=1, limit=4
    $region2: #{tpu_custom_call.1} parent=1 // loop_pre_header
      _
    $region3: #{tpu_custom_call.1} parent=1 // loop_header
      %s15 = sphi 0, %s19
      %p16 = scmp.ge.s32.totalorder %s15, 4
      %s25 = sphi 0, %s27
      %s28 = sphi 0, %s25
      %s29 = sphi 0, %s28
      %s45 = sphi 0, %s29
      %s49 = sphi 0, %s49
      %s51 = sphi 0, %s49
      %s52 = sphi 0, %s51
      %s66 = sphi 0, %s52
      %s70 = sphi 0, %s70
      %s72 = sphi 0, %s70
      %s73 = sphi 0, %s72
      %s87 = sphi 0, %s73
      %s91 = sphi 0, %s91
      %s93 = sphi 0, %s91
      %s94 = sphi 0, %s93
      %s108 = sphi 0, %s94
      %s112 = sphi 0, %s112
      %s114 = sphi 0, %s112
      %s115 = sphi 0, %s114
      %s129 = sphi 0, %s115
      %s133 = sphi 0, %s133
      %s135 = sphi 0, %s133
      %s136 = sphi 0, %s135
      %s150 = sphi 0, %s136
      %s154 = sphi 0, %s154
      %s156 = sphi 0, %s154
      %s157 = sphi 0, %s156
      %s171 = sphi 0, %s157
      %s175 = sphi 0, %s175
      %s177 = sphi 0, %s175
      %s178 = sphi 0, %s177
      %s192 = sphi 0, %s178
      %s198 = sphi 0, %s200
      %s201 = sphi 0, %s198
      %s202 = sphi 0, %s201
      %s218 = sphi 0, %s202
    $region4: #{tpu_custom_call.1} parent=1 // loop_header_branch
      %18 = sbr.rel (%p16) target = $region8
    $region5: #{tpu_custom_call.1} parent=1 // loop_body
      %s20 = ssub.s32 %s15, 1
      %s21 = ssub.s32 %s15, 2
      %s22 = sadd.s32 %s15, 1
      %s23 = ssub.s32 %s15, %s22
      %p24 = scmp.eq.s32.totalorder %s23, 0
      %s26 = sadd.s32 %s25, 1
      %s27 = scalar_select %p24, %s25, %s26
      %p30 = pneg %p24
      %p31 = scmp.eq.s32.totalorder %s15, 1
      %p32 = por %p30, %p31
      %p33 = scmp.ne.s32.totalorder %s25, %s28
      %p34 = scmp.eq.s32.totalorder %s15, 0
      %p35 = por %p33, %p34
      %p36 = scmp.ne.s32.totalorder %s25, %s28
      %p37 = scmp.eq.s32.totalorder %s20, 1
      %p38 = por %p36, %p37
      %p39 = scmp.ne.s32.totalorder %s28, %s29
      %p40 = scmp.eq.s32.totalorder %s20, 0
      %p41 = por %p39, %p40
      %p42 = scmp.ne.s32.totalorder %s28, %s29
      %p43 = scmp.eq.s32.totalorder %s21, 1
      %p44 = por %p42, %p43
      %p46 = scmp.ne.s32.totalorder %s29, %s45
      %p47 = scmp.eq.s32.totalorder %s21, 0
      %p48 = por %p46, %p47
      %s50 = sadd.s32 %s49, 1
      %p53 = scmp.eq.s32.totalorder %s15, 1
      %p54 = scmp.ne.s32.totalorder %s49, %s51
      %p55 = scmp.eq.s32.totalorder %s15, 0
      %p56 = por %p54, %p55
      %p57 = scmp.ne.s32.totalorder %s49, %s51
      %p58 = scmp.eq.s32.totalorder %s20, 1
      %p59 = por %p57, %p58
      %p60 = scmp.ne.s32.totalorder %s51, %s52
      %p61 = scmp.eq.s32.totalorder %s20, 0
      %p62 = por %p60, %p61
      %p63 = scmp.ne.s32.totalorder %s51, %s52
      %p64 = scmp.eq.s32.totalorder %s21, 1
      %p65 = por %p63, %p64
      %p67 = scmp.ne.s32.totalorder %s52, %s66
      %p68 = scmp.eq.s32.totalorder %s21, 0
      %p69 = por %p67, %p68
      %s71 = sadd.s32 %s70, 1
      %p74 = scmp.eq.s32.totalorder %s15, 1
      %p75 = scmp.ne.s32.totalorder %s70, %s72
      %p76 = scmp.eq.s32.totalorder %s15, 0
      %p77 = por %p75, %p76
      %p78 = scmp.ne.s32.totalorder %s70, %s72
      %p79 = scmp.eq.s32.totalorder %s20, 1
      %p80 = por %p78, %p79
      %p81 = scmp.ne.s32.totalorder %s72, %s73
      %p82 = scmp.eq.s32.totalorder %s20, 0
      %p83 = por %p81, %p82
      %p84 = scmp.ne.s32.totalorder %s72, %s73
      %p85 = scmp.eq.s32.totalorder %s21, 1
      %p86 = por %p84, %p85
      %p88 = scmp.ne.s32.totalorder %s73, %s87
      %p89 = scmp.eq.s32.totalorder %s21, 0
      %p90 = por %p88, %p89
      %s92 = sadd.s32 %s91, 1
      %p95 = scmp.eq.s32.totalorder %s15, 1
      %p96 = scmp.ne.s32.totalorder %s91, %s93
      %p97 = scmp.eq.s32.totalorder %s15, 0
      %p98 = por %p96, %p97
      %p99 = scmp.ne.s32.totalorder %s91, %s93
      %p100 = scmp.eq.s32.totalorder %s20, 1
      %p101 = por %p99, %p100
      %p102 = scmp.ne.s32.totalorder %s93, %s94
      %p103 = scmp.eq.s32.totalorder %s20, 0
      %p104 = por %p102, %p103
      %p105 = scmp.ne.s32.totalorder %s93, %s94
      %p106 = scmp.eq.s32.totalorder %s21, 1
      %p107 = por %p105, %p106
      %p109 = scmp.ne.s32.totalorder %s94, %s108
      %p110 = scmp.eq.s32.totalorder %s21, 0
      %p111 = por %p109, %p110
      %s113 = sadd.s32 %s112, 1
      %p116 = scmp.eq.s32.totalorder %s15, 1
      %p117 = scmp.ne.s32.totalorder %s112, %s114
      %p118 = scmp.eq.s32.totalorder %s15, 0
      %p119 = por %p117, %p118
      %p120 = scmp.ne.s32.totalorder %s112, %s114
      %p121 = scmp.eq.s32.totalorder %s20, 1
      %p122 = por %p120, %p121
      %p123 = scmp.ne.s32.totalorder %s114, %s115
      %p124 = scmp.eq.s32.totalorder %s20, 0
      %p125 = por %p123, %p124
      %p126 = scmp.ne.s32.totalorder %s114, %s115
      %p127 = scmp.eq.s32.totalorder %s21, 1
      %p128 = por %p126, %p127
      %p130 = scmp.ne.s32.totalorder %s115, %s129
      %p131 = scmp.eq.s32.totalorder %s21, 0
      %p132 = por %p130, %p131
      %s134 = sadd.s32 %s133, 1
      %p137 = scmp.eq.s32.totalorder %s15, 1
      %p138 = scmp.ne.s32.totalorder %s133, %s135
      %p139 = scmp.eq.s32.totalorder %s15, 0
      %p140 = por %p138, %p139
      %p141 = scmp.ne.s32.totalorder %s133, %s135
      %p142 = scmp.eq.s32.totalorder %s20, 1
      %p143 = por %p141, %p142
      %p144 = scmp.ne.s32.totalorder %s135, %s136
      %p145 = scmp.eq.s32.totalorder %s20, 0
      %p146 = por %p144, %p145
      %p147 = scmp.ne.s32.totalorder %s135, %s136
      %p148 = scmp.eq.s32.totalorder %s21, 1
      %p149 = por %p147, %p148
      %p151 = scmp.ne.s32.totalorder %s136, %s150
      %p152 = scmp.eq.s32.totalorder %s21, 0
      %p153 = por %p151, %p152
      %s155 = sadd.s32 %s154, 1
      %p158 = scmp.eq.s32.totalorder %s15, 1
      %p159 = scmp.ne.s32.totalorder %s154, %s156
      %p160 = scmp.eq.s32.totalorder %s15, 0
      %p161 = por %p159, %p160
      %p162 = scmp.ne.s32.totalorder %s154, %s156
      %p163 = scmp.eq.s32.totalorder %s20, 1
      %p164 = por %p162, %p163
      %p165 = scmp.ne.s32.totalorder %s156, %s157
      %p166 = scmp.eq.s32.totalorder %s20, 0
      %p167 = por %p165, %p166
      %p168 = scmp.ne.s32.totalorder %s156, %s157
      %p169 = scmp.eq.s32.totalorder %s21, 1
      %p170 = por %p168, %p169
      %p172 = scmp.ne.s32.totalorder %s157, %s171
      %p173 = scmp.eq.s32.totalorder %s21, 0
      %p174 = por %p172, %p173
      %s176 = sadd.s32 %s175, 1
      %p179 = scmp.eq.s32.totalorder %s15, 1
      %p180 = scmp.ne.s32.totalorder %s175, %s177
      %p181 = scmp.eq.s32.totalorder %s15, 0
      %p182 = por %p180, %p181
      %p183 = scmp.ne.s32.totalorder %s175, %s177
      %p184 = scmp.eq.s32.totalorder %s20, 1
      %p185 = por %p183, %p184
      %p186 = scmp.ne.s32.totalorder %s177, %s178
      %p187 = scmp.eq.s32.totalorder %s20, 0
      %p188 = por %p186, %p187
      %p189 = scmp.ne.s32.totalorder %s177, %s178
      %p190 = scmp.eq.s32.totalorder %s21, 1
      %p191 = por %p189, %p190
      %p193 = scmp.ne.s32.totalorder %s178, %s192
      %p194 = scmp.eq.s32.totalorder %s21, 0
      %p195 = por %p193, %p194
      %s196 = ssub.s32 %s15, %s22
      %p197 = scmp.eq.s32.totalorder %s196, 0
      %s199 = sadd.s32 %s198, 1
      %s200 = scalar_select %p197, %s198, %s199
      %p203 = pneg %p197
      %p204 = scmp.eq.s32.totalorder %s15, 1
      %p205 = por %p203, %p204
      %p206 = scmp.ne.s32.totalorder %s198, %s201
      %p207 = scmp.eq.s32.totalorder %s15, 0
      %p208 = por %p206, %p207
      %p209 = scmp.ne.s32.totalorder %s198, %s201
      %p210 = scmp.eq.s32.totalorder %s20, 1
      %p211 = por %p209, %p210
      %p212 = scmp.ne.s32.totalorder %s201, %s202
      %p213 = scmp.eq.s32.totalorder %s20, 0
      %p214 = por %p212, %p213
      %p215 = scmp.ne.s32.totalorder %s201, %s202
      %p216 = scmp.eq.s32.totalorder %s21, 1
      %p217 = por %p215, %p216
      %p219 = scmp.ne.s32.totalorder %s202, %s218
      %p220 = scmp.eq.s32.totalorder %s21, 0
      %p221 = por %p219, %p220
      %p222 = scmp.le.s32.totalorder 1, %s15
      %p223 = scmp.lt.s32.totalorder %s15, 3
      %p224 = pnand %p222, %p223
      %p225 = pneg %p224
      // Predicated region
      $region9: #{tpu_custom_call.1} parent=5 // pred_check
        _
      $region10: #{tpu_custom_call.1} parent=5 // pred_check_branch
        %227 = sbr.rel (%p224) target = $region12
      $region11: #{tpu_custom_call.1} parent=5 // pred_region
        %s228 = ssub.s32 %s15, 1
        // Predicated region
        $region13: #{tpu_custom_call.1} parent=11 // pred_check
          %p229 = pneg %p62
        $region14: #{tpu_custom_call.1} parent=11 // pred_check_branch
          %231 = sbr.rel (%p229) target = $region16
        $region15: #{tpu_custom_call.1} parent=11 // pred_region
          _
        $region16: #{tpu_custom_call.1} parent=11 // pred_fallthru
          _
        // Predicated region
        $region17: #{tpu_custom_call.1} parent=11 // pred_check
          %p232 = pneg %p83
        $region18: #{tpu_custom_call.1} parent=11 // pred_check_branch
          %234 = sbr.rel (%p232) target = $region20
        $region19: #{tpu_custom_call.1} parent=11 // pred_region
          _
        $region20: #{tpu_custom_call.1} parent=11 // pred_fallthru
          _
        // Predicated region
        $region21: #{tpu_custom_call.1} parent=11 // pred_check
          %p235 = pneg %p104
        $region22: #{tpu_custom_call.1} parent=11 // pred_check_branch
          %237 = sbr.rel (%p235) target = $region24
        $region23: #{tpu_custom_call.1} parent=11 // pred_region
          _
        $region24: #{tpu_custom_call.1} parent=11 // pred_fallthru
          _
        // Predicated region
        $region25: #{tpu_custom_call.1} parent=11 // pred_check
          %p238 = pneg %p125
        $region26: #{tpu_custom_call.1} parent=11 // pred_check_branch
          %240 = sbr.rel (%p238) target = $region28
        $region27: #{tpu_custom_call.1} parent=11 // pred_region
          _
        $region28: #{tpu_custom_call.1} parent=11 // pred_fallthru
          _
        // Predicated region
        $region29: #{tpu_custom_call.1} parent=11 // pred_check
          %p241 = pneg %p146
        $region30: #{tpu_custom_call.1} parent=11 // pred_check_branch
          %243 = sbr.rel (%p241) target = $region32
        $region31: #{tpu_custom_call.1} parent=11 // pred_region
          _
        $region32: #{tpu_custom_call.1} parent=11 // pred_fallthru
          _
        // Predicated region
        $region33: #{tpu_custom_call.1} parent=11 // pred_check
          %p244 = pneg %p167
        $region34: #{tpu_custom_call.1} parent=11 // pred_check_branch
          %246 = sbr.rel (%p244) target = $region36
        $region35: #{tpu_custom_call.1} parent=11 // pred_region
          _
        $region36: #{tpu_custom_call.1} parent=11 // pred_fallthru
          _
        // Predicated region
        $region37: #{tpu_custom_call.1} parent=11 // pred_check
          %p247 = pneg %p188
        $region38: #{tpu_custom_call.1} parent=11 // pred_check_branch
          %249 = sbr.rel (%p247) target = $region40
        $region39: #{tpu_custom_call.1} parent=11 // pred_region
          _
        $region40: #{tpu_custom_call.1} parent=11 // pred_fallthru
          _
      $region12: #{tpu_custom_call.1} parent=5 // pred_fallthru
        _
      %p250 = scmp.lt.s32.totalorder %s15, 2
      // Predicated region
      $region41: #{tpu_custom_call.1} parent=5 // pred_check
        %p251 = pneg %p250
      $region42: #{tpu_custom_call.1} parent=5 // pred_check_branch
        %253 = sbr.rel (%p251) target = $region44
      $region43: #{tpu_custom_call.1} parent=5 // pred_region
        // Predicated region
        $region45: #{tpu_custom_call.1} parent=43 // pred_check
          %p254 = pneg %p35
        $region46: #{tpu_custom_call.1} parent=43 // pred_check_branch
          %256 = sbr.rel (%p254) target = $region48
        $region47: #{tpu_custom_call.1} parent=43 // pred_region
          %s257 = smul.u32 16, %s15
          %s258 = ssub.s32 25, %s257
          %p259 = scmp.lt.s32.totalorder %s258, 16
          %s260 = scalar_select %p259, %s258, 16
          %s261 = smul.u32 128, %s260
          %p262 = scmp.lt.s32.totalorder %s257, 24
          %s263 = scalar_select %p262, %s257, 24
          %s264 = smul.addr %s263, 8
          %s265 = scalar_lea.vmem %s0, %s264
          %s266 = smul.u32 16, %s15
          %s267 = ssub.s32 25, %s266
          %p268 = scmp.lt.s32.totalorder %s267, 16
          %s269 = scalar_select %p268, %s267, 16
          %s270 = smul.u32 128, %s269
        $region48: #{tpu_custom_call.1} parent=43 // pred_fallthru
          _
      $region44: #{tpu_custom_call.1} parent=5 // pred_fallthru
        _
      %p271 = scmp.le.s32.totalorder 1, %s15
      %p272 = scmp.lt.s32.totalorder %s15, 3
      %p273 = pnand %p271, %p272
      %p274 = pneg %p273
      // Predicated region
      $region49: #{tpu_custom_call.1} parent=5 // pred_check
        _
      $region50: #{tpu_custom_call.1} parent=5 // pred_check_branch
        %276 = sbr.rel (%p273) target = $region52
      $region51: #{tpu_custom_call.1} parent=5 // pred_region
        %s277 = ssub.s32 %s15, 1
        %s278 = smul.u32 16, %s20
        %s279 = ssub.s32 25, %s278
        %p280 = scmp.lt.s32.totalorder %s279, 16
        %s281 = scalar_select %p280, %s279, 16
        %s282 = smul.u32 128, %s281
        %p283 = scmp.lt.s32.totalorder %s278, 24
        %s284 = scalar_select %p283, %s278, 24
        %s285 = smul.addr %s284, 8
        %s286 = scalar_lea.vmem %s0, %s285
        %p287 = pneg %p41
        %p288 = pneg %p38
        %p289 = pneg %p62
        %p290 = pneg %p59
        %p291 = pneg %p83
        %p292 = pneg %p80
        %p293 = pneg %p104
        %p294 = pneg %p101
        %p295 = pneg %p125
        %p296 = pneg %p122
        %p297 = pneg %p146
        %p298 = pneg %p143
        %p299 = pneg %p167
        %p300 = pneg %p164
        %p301 = pneg %p188
        %p302 = pneg %p185
        %p303 = pneg %p214
        %p304 = pneg %p211
        %s305 = sand.u32 %s201, 1
        %s306 = sand.u32 %s201, 1
        %s307 = smul.addr %s306, 128
        %s308 = scalar_lea.vmem [#allocation3], %s307
        %s309 = smul.u32 16, %s20
        %s310 = ssub.s32 25, %s309
        %p311 = scmp.lt.s32.totalorder %s310, 16
        %s312 = scalar_select %p311, %s310, 16
        %s313 = smul.u32 128, %s312
        %p314 = scmp.lt.s32.totalorder %s309, 24
        %s315 = scalar_select %p314, %s309, 24
        %s316 = smul.addr %s315, 8
        %s317 = scalar_lea.vmem %s0, %s316
        %s318 = smul.u32 16, %s20
        %s319 = ssub.s32 25, %s318
        %p320 = scmp.lt.s32.totalorder %s319, 16
        %s321 = scalar_select %p320, %s319, 16
        %s322 = smul.u32 128, %s321
        %s323 = smul.u32 16, %s20
        %s324 = ssub.s32 25, %s323
        %p325 = scmp.lt.s32.totalorder %s324, 16
        %s326 = scalar_select %p325, %s324, 16
        %s327 = smul.u32 128, %s326
        %v329 = vld [vmem:[%s317] sm:$0xff]
        %v330 = vld [vmem:[%s317 + $0x8] sm:$0xff]
        %v331 = vld [vmem:[%s317 + $0x10] sm:$0xff]
        %v332 = vld [vmem:[%s317 + $0x18] sm:$0xff]
        %v333 = vld [vmem:[%s317 + $0x20] sm:$0xff]
        %v334 = vld [vmem:[%s317 + $0x28] sm:$0xff]
        %v335 = vld [vmem:[%s317 + $0x30] sm:$0xff]
        %v336 = vld [vmem:[%s317 + $0x38] sm:$0xff]
        %v337 = vld [vmem:[%s317 + $0x40] sm:$0xff]
        %v338 = vld [vmem:[%s317 + $0x48] sm:$0xff]
        %v339 = vld [vmem:[%s317 + $0x50] sm:$0xff]
        %v340 = vld [vmem:[%s317 + $0x58] sm:$0xff]
        %v341 = vld [vmem:[%s317 + $0x60] sm:$0xff]
        %v342 = vld [vmem:[%s317 + $0x68] sm:$0xff]
        %v343 = vld [vmem:[%s317 + $0x70] sm:$0xff]
        %v344 = vld [vmem:[%s317 + $0x78] sm:$0xff]
        %v345 = vpack.c.bf16 %v330, %v329
        %v346 = vpack.c.bf16 %v332, %v331
        %v347 = vpack.c.bf16 %v334, %v333
        %v348 = vpack.c.bf16 %v336, %v335
        %v349 = vpack.c.bf16 %v338, %v337
        %v350 = vpack.c.bf16 %v340, %v339
        %v351 = vpack.c.bf16 %v342, %v341
        %v352 = vpack.c.bf16 %v344, %v343
        %v353 = vld [vmem:[%s1] sm:$0xff]
        %v354 = vld [vmem:[%s1 + $0x8] sm:$0xff]
        %v355 = vld [vmem:[%s1 + $0x10] sm:$0xff]
        %v356 = vld [vmem:[%s1 + $0x18] sm:$0xff]
        %v357 = vld [vmem:[%s1 + $0x20] sm:$0xff]
        %v358 = vld [vmem:[%s1 + $0x28] sm:$0xff]
        %v359 = vld [vmem:[%s1 + $0x30] sm:$0xff]
        %v360 = vld [vmem:[%s1 + $0x38] sm:$0xff]
        %v361 = vld [vmem:[%s2] sm:$0x3]
        %v363 = vlaneseq
        %v364 = vshrl.u32 %v363, 7
        %v365 = vsub.s32 0, %v364
        %v366 = vrot.slane %v361, %v365
        %v367 = vlaneseq
        %v368 = vshrl.u32 %v367, 7
        %v369 = vsub.s32 1, %v368
        %v370 = vrot.slane %v361, %v369
        %v381 = vunpack.c.l.b16 %v353
        %v382 = vunpack.c.h.b16 %v353
        %v383 = vunpack.c.l.b16 %v354
        %v384 = vunpack.c.h.b16 %v354
        %v385 = vunpack.c.l.b16 %v355
        %v386 = vunpack.c.h.b16 %v355
        %v387 = vunpack.c.l.b16 %v356
        %v388 = vunpack.c.h.b16 %v356
        %v389 = vunpack.c.l.b16 %v357
        %v390 = vunpack.c.h.b16 %v357
        %v391 = vunpack.c.l.b16 %v358
        %v392 = vunpack.c.h.b16 %v358
        %v393 = vunpack.c.l.b16 %v359
        %v394 = vunpack.c.h.b16 %v359
        %v395 = vunpack.c.l.b16 %v360
        %v396 = vunpack.c.h.b16 %v360
        %v397 = vpack.c.b16 %v383, %v381
        %v398 = vpack.c.b16 %v384, %v382
        %v399 = vpack.c.b16 %v387, %v385
        %v400 = vpack.c.b16 %v388, %v386
        %v401 = vpack.c.b16 %v391, %v389
        %v402 = vpack.c.b16 %v392, %v390
        %v403 = vpack.c.b16 %v395, %v393
        %v404 = vpack.c.b16 %v396, %v394
        %vm413 = vcmask 523264
        %v415 = vsel %vm413, %v345, 0
        %v418 = vsel %vm413, %v346, 0
        %v421 = vsel %vm413, %v347, 0
        %v424 = vsel %vm413, %v348, 0
        %v427 = vsel %vm413, %v349, 0
        %v430 = vsel %vm413, %v350, 0
        %v433 = vsel %vm413, %v351, 0
        %v436 = vsel %vm413, %v352, 0
        %438 = vmatprep.subr.bf16.mxu0 %v398
        %439 = vmatpush1.bf16.msra.mxu0 %v397
        %440 = vmatprep.subr.bf16.mxu0 %v400
        %441 = vmatpush1.bf16.msra.mxu0 %v399
        %442 = vmatprep.subr.bf16.mxu0 %v402
        %443 = vmatpush1.bf16.msra.mxu0 %v401
        %444 = vmatprep.subr.bf16.mxu0 %v404
        %445 = vmatpush1.bf16.msra.mxu0 %v403
        %446 = vmatprep.subr.bf16.mxu0 0
        %447 = vmatpush1.bf16.msra.mxu0 0
        %448 = vmatprep.subr.bf16.mxu0 0
        %449 = vmatpush1.bf16.msra.mxu0 0
        %450 = vmatprep.subr.bf16.mxu0 0
        %451 = vmatpush1.bf16.msra.mxu0 0
        %452 = vmatprep.subr.bf16.mxu0 0
        %453 = vmatpush1.bf16.msra.mxu0 0
        %454 = vmatprep.subr.bf16.mxu0 0
        %455 = vmatpush1.bf16.msra.mxu0 0
        %456 = vmatprep.subr.bf16.mxu0 0
        %457 = vmatpush1.bf16.msra.mxu0 0
        %458 = vmatprep.subr.bf16.mxu0 0
        %459 = vmatpush1.bf16.msra.mxu0 0
        %460 = vmatprep.subr.bf16.mxu0 0
        %461 = vmatpush1.bf16.msra.mxu0 0
        %462 = vmatprep.subr.bf16.mxu0 0
        %463 = vmatpush1.bf16.msra.mxu0 0
        %464 = vmatprep.subr.bf16.mxu0 0
        %465 = vmatpush1.bf16.msra.mxu0 0
        %466 = vmatprep.subr.bf16.mxu0 0
        %467 = vmatpush1.bf16.msra.mxu0 0
        %468 = vmatprep.subr.bf16.mxu0 0
        %469 = vmatpush1.bf16.msra.mxu0 0
        %470 = vmatprep.mubr.bf16.mxu0 0
        %471 = vmatmul.mubr.bf16.gmra.mrb[0].mxu0 %v415
        %v472 = vpop.f32.mrb[0].mxu0
        %v473 = vadd.f32 %v366, %v472
        %v474 = vpop.f32.mrb[0].mxu0
        %v475 = vadd.f32 %v370, %v474
        %v476 = vpop.f32.mrb[0].mxu0
        %v477 = vadd.f32 %v366, %v476
        %v478 = vpop.f32.mrb[0].mxu0
        %v479 = vadd.f32 %v370, %v478
        %480 = vmatprep.mubr.bf16.mxu0 0
        %481 = vmatmul.mubr.bf16.gmra.mrb[0].mxu0 %v418
        %v482 = vpop.f32.mrb[0].mxu0
        %v483 = vadd.f32 %v366, %v482
        %v484 = vpop.f32.mrb[0].mxu0
        %v485 = vadd.f32 %v370, %v484
        %v486 = vpop.f32.mrb[0].mxu0
        %v487 = vadd.f32 %v366, %v486
        %v488 = vpop.f32.mrb[0].mxu0
        %v489 = vadd.f32 %v370, %v488
        %490 = vmatprep.mubr.bf16.mxu0 0
        %491 = vmatmul.mubr.bf16.gmra.mrb[0].mxu0 %v421
        %v492 = vpop.f32.mrb[0].mxu0
        %v493 = vadd.f32 %v366, %v492
        %v494 = vpop.f32.mrb[0].mxu0
        %v495 = vadd.f32 %v370, %v494
        %v496 = vpop.f32.mrb[0].mxu0
        %v497 = vadd.f32 %v366, %v496
        %v498 = vpop.f32.mrb[0].mxu0
        %v499 = vadd.f32 %v370, %v498
        %500 = vmatprep.mubr.bf16.mxu0 0
        %501 = vmatmul.mubr.bf16.gmra.mrb[0].mxu0 %v424
        %v502 = vpop.f32.mrb[0].mxu0
        %v503 = vadd.f32 %v366, %v502
        %v504 = vpop.f32.mrb[0].mxu0
        %v505 = vadd.f32 %v370, %v504
        %v506 = vpop.f32.mrb[0].mxu0
        %v507 = vadd.f32 %v366, %v506
        %v508 = vpop.f32.mrb[0].mxu0
        %v509 = vadd.f32 %v370, %v508
        %510 = vmatprep.mubr.bf16.mxu0 0
        %511 = vmatmul.mubr.bf16.gmra.mrb[0].mxu0 %v427
        %v512 = vpop.f32.mrb[0].mxu0
        %v513 = vadd.f32 %v366, %v512
        %v514 = vpop.f32.mrb[0].mxu0
        %v515 = vadd.f32 %v370, %v514
        %v516 = vpop.f32.mrb[0].mxu0
        %v517 = vadd.f32 %v366, %v516
        %v518 = vpop.f32.mrb[0].mxu0
        %v519 = vadd.f32 %v370, %v518
        %520 = vmatprep.mubr.bf16.mxu0 0
        %521 = vmatmul.mubr.bf16.gmra.mrb[0].mxu0 %v430
        %v522 = vpop.f32.mrb[0].mxu0
        %v523 = vadd.f32 %v366, %v522
        %v524 = vpop.f32.mrb[0].mxu0
        %v525 = vadd.f32 %v370, %v524
        %v526 = vpop.f32.mrb[0].mxu0
        %v527 = vadd.f32 %v366, %v526
        %v528 = vpop.f32.mrb[0].mxu0
        %v529 = vadd.f32 %v370, %v528
        %530 = vmatprep.mubr.bf16.mxu0 0
        %531 = vmatmul.mubr.bf16.gmra.mrb[0].mxu0 %v433
        %v532 = vpop.f32.mrb[0].mxu0
        %v533 = vadd.f32 %v366, %v532
        %v534 = vpop.f32.mrb[0].mxu0
        %v535 = vadd.f32 %v370, %v534
        %v536 = vpop.f32.mrb[0].mxu0
        %v537 = vadd.f32 %v366, %v536
        %v538 = vpop.f32.mrb[0].mxu0
        %v539 = vadd.f32 %v370, %v538
        %540 = vmatprep.mubr.bf16.mxu0 0
        %541 = vmatmul.mubr.bf16.gmra.mrb[0].mxu0 %v436
        %v542 = vpop.f32.mrb[0].mxu0
        %v543 = vadd.f32 %v366, %v542
        %v544 = vpop.f32.mrb[0].mxu0
        %v545 = vadd.f32 %v370, %v544
        %v546 = vpop.f32.mrb[0].mxu0
        %v547 = vadd.f32 %v366, %v546
        %v548 = vpop.f32.mrb[0].mxu0
        %v549 = vadd.f32 %v370, %v548
        %550 = vdwg.mxu0
        %s551 = sld [smem:[#allocation2]]
        %vm552 = vcmp.ge.f32.partialorder %v473, 0.0
        %vm553 = vcmp.ge.f32.partialorder %v477, 0.0
        %vm554 = vcmp.ge.f32.partialorder %v483, 0.0
        %vm555 = vcmp.ge.f32.partialorder %v487, 0.0
        %vm556 = vcmp.ge.f32.partialorder %v493, 0.0
        %vm557 = vcmp.ge.f32.partialorder %v497, 0.0
        %vm558 = vcmp.ge.f32.partialorder %v503, 0.0
        %vm559 = vcmp.ge.f32.partialorder %v507, 0.0
        %vm560 = vcmp.ge.f32.partialorder %v513, 0.0
        %vm561 = vcmp.ge.f32.partialorder %v517, 0.0
        %vm562 = vcmp.ge.f32.partialorder %v523, 0.0
        %vm563 = vcmp.ge.f32.partialorder %v527, 0.0
        %vm564 = vcmp.ge.f32.partialorder %v533, 0.0
        %vm565 = vcmp.ge.f32.partialorder %v537, 0.0
        %vm566 = vcmp.ge.f32.partialorder %v543, 0.0
        %vm567 = vcmp.ge.f32.partialorder %v547, 0.0
        %v568 = vstv %s551
        %v569 = vmul.f32 %v568, %v473
        %v570 = vmul.f32 %v568, %v477
        %v571 = vmul.f32 %v568, %v483
        %v572 = vmul.f32 %v568, %v487
        %v573 = vmul.f32 %v568, %v493
        %v574 = vmul.f32 %v568, %v497
        %v575 = vmul.f32 %v568, %v503
        %v576 = vmul.f32 %v568, %v507
        %v577 = vmul.f32 %v568, %v513
        %v578 = vmul.f32 %v568, %v517
        %v579 = vmul.f32 %v568, %v523
        %v580 = vmul.f32 %v568, %v527
        %v581 = vmul.f32 %v568, %v533
        %v582 = vmul.f32 %v568, %v537
        %v583 = vmul.f32 %v568, %v543
        %v584 = vmul.f32 %v568, %v547
        %v585 = vsel %vm552, %v473, %v569
        %v586 = vsel %vm553, %v477, %v570
        %v587 = vsel %vm554, %v483, %v571
        %v588 = vsel %vm555, %v487, %v572
        %v589 = vsel %vm556, %v493, %v573
        %v590 = vsel %vm557, %v497, %v574
        %v591 = vsel %vm558, %v503, %v575
        %v592 = vsel %vm559, %v507, %v576
        %v593 = vsel %vm560, %v513, %v577
        %v594 = vsel %vm561, %v517, %v578
        %v595 = vsel %vm562, %v523, %v579
        %v596 = vsel %vm563, %v527, %v580
        %v597 = vsel %vm564, %v533, %v581
        %v598 = vsel %vm565, %v537, %v582
        %v599 = vsel %vm566, %v543, %v583
        %v600 = vsel %vm567, %v547, %v584
        %601 = vmax.xlane.f32.xlu0 %v475
        %v602 = vpop.xlane.xlu0 %601
        %603 = vmax.xlane.f32.xlu0 %v479
        %v604 = vpop.xlane.xlu0 %603
        %605 = vmax.xlane.f32.xlu0 %v485
        %v606 = vpop.xlane.xlu0 %605
        %607 = vmax.xlane.f32.xlu0 %v489
        %v608 = vpop.xlane.xlu0 %607
        %609 = vmax.xlane.f32.xlu0 %v495
        %v610 = vpop.xlane.xlu0 %609
        %611 = vmax.xlane.f32.xlu0 %v499
        %v612 = vpop.xlane.xlu0 %611
        %613 = vmax.xlane.f32.xlu0 %v505
        %v614 = vpop.xlane.xlu0 %613
        %615 = vmax.xlane.f32.xlu0 %v509
        %v616 = vpop.xlane.xlu0 %615
        %617 = vmax.xlane.f32.xlu0 %v515
        %v618 = vpop.xlane.xlu0 %617
        %619 = vmax.xlane.f32.xlu0 %v519
        %v620 = vpop.xlane.xlu0 %619
        %621 = vmax.xlane.f32.xlu0 %v525
        %v622 = vpop.xlane.xlu0 %621
        %623 = vmax.xlane.f32.xlu0 %v529
        %v624 = vpop.xlane.xlu0 %623
        %625 = vmax.xlane.f32.xlu0 %v535
        %v626 = vpop.xlane.xlu0 %625
        %627 = vmax.xlane.f32.xlu0 %v539
        %v628 = vpop.xlane.xlu0 %627
        %629 = vmax.xlane.f32.xlu0 %v545
        %v630 = vpop.xlane.xlu0 %629
        %631 = vmax.xlane.f32.xlu0 %v549
        %v632 = vpop.xlane.xlu0 %631
        %v633 = vsub.f32 %v475, %v602
        %v634 = vsub.f32 %v479, %v604
        %v635 = vsub.f32 %v485, %v606
        %v636 = vsub.f32 %v489, %v608
        %v637 = vsub.f32 %v495, %v610
        %v638 = vsub.f32 %v499, %v612
        %v639 = vsub.f32 %v505, %v614
        %v640 = vsub.f32 %v509, %v616
        %v641 = vsub.f32 %v515, %v618
        %v642 = vsub.f32 %v519, %v620
        %v643 = vsub.f32 %v525, %v622
        %v644 = vsub.f32 %v529, %v624
        %v645 = vsub.f32 %v535, %v626
        %v646 = vsub.f32 %v539, %v628
        %v647 = vsub.f32 %v545, %v630
        %v648 = vsub.f32 %v549, %v632
        %v649 = vmul.f32 %v633, 1.442695
        %v650 = vpow.pop %v649
        %v651 = vmul.f32 %v634, 1.442695
        %v652 = vpow.pop %v651
        %v653 = vmul.f32 %v635, 1.442695
        %v654 = vpow.pop %v653
        %v655 = vmul.f32 %v636, 1.442695
        %v656 = vpow.pop %v655
        %v657 = vmul.f32 %v637, 1.442695
        %v658 = vpow.pop %v657
        %v659 = vmul.f32 %v638, 1.442695
        %v660 = vpow.pop %v659
        %v661 = vmul.f32 %v639, 1.442695
        %v662 = vpow.pop %v661
        %v663 = vmul.f32 %v640, 1.442695
        %v664 = vpow.pop %v663
        %v665 = vmul.f32 %v641, 1.442695
        %v666 = vpow.pop %v665
        %v667 = vmul.f32 %v642, 1.442695
        %v668 = vpow.pop %v667
        %v669 = vmul.f32 %v643, 1.442695
        %v670 = vpow.pop %v669
        %v671 = vmul.f32 %v644, 1.442695
        %v672 = vpow.pop %v671
        %v673 = vmul.f32 %v645, 1.442695
        %v674 = vpow.pop %v673
        %v675 = vmul.f32 %v646, 1.442695
        %v676 = vpow.pop %v675
        %v677 = vmul.f32 %v647, 1.442695
        %v678 = vpow.pop %v677
        %v679 = vmul.f32 %v648, 1.442695
        %v680 = vpow.pop %v679
        %681 = vadd.xlane.f32.xlu0 %v650
        %v682 = vpop.xlane.xlu0 %681
        %683 = vadd.xlane.f32.xlu0 %v652
        %v684 = vpop.xlane.xlu0 %683
        %685 = vadd.xlane.f32.xlu0 %v654
        %v686 = vpop.xlane.xlu0 %685
        %687 = vadd.xlane.f32.xlu0 %v656
        %v688 = vpop.xlane.xlu0 %687
        %689 = vadd.xlane.f32.xlu0 %v658
        %v690 = vpop.xlane.xlu0 %689
        %691 = vadd.xlane.f32.xlu0 %v660
        %v692 = vpop.xlane.xlu0 %691
        %693 = vadd.xlane.f32.xlu0 %v662
        %v694 = vpop.xlane.xlu0 %693
        %695 = vadd.xlane.f32.xlu0 %v664
        %v696 = vpop.xlane.xlu0 %695
        %697 = vadd.xlane.f32.xlu0 %v666
        %v698 = vpop.xlane.xlu0 %697
        %699 = vadd.xlane.f32.xlu0 %v668
        %v700 = vpop.xlane.xlu0 %699
        %701 = vadd.xlane.f32.xlu0 %v670
        %v702 = vpop.xlane.xlu0 %701
        %703 = vadd.xlane.f32.xlu0 %v672
        %v704 = vpop.xlane.xlu0 %703
        %705 = vadd.xlane.f32.xlu0 %v674
        %v706 = vpop.xlane.xlu0 %705
        %707 = vadd.xlane.f32.xlu0 %v676
        %v708 = vpop.xlane.xlu0 %707
        %709 = vadd.xlane.f32.xlu0 %v678
        %v710 = vpop.xlane.xlu0 %709
        %711 = vadd.xlane.f32.xlu0 %v680
        %v712 = vpop.xlane.xlu0 %711
        %v713 = vrcp.pop %v682
        %v714 = vrcp.pop %v684
        %v715 = vrcp.pop %v686
        %v716 = vrcp.pop %v688
        %v717 = vrcp.pop %v690
        %v718 = vrcp.pop %v692
        %v719 = vrcp.pop %v694
        %v720 = vrcp.pop %v696
        %v721 = vrcp.pop %v698
        %v722 = vrcp.pop %v700
        %v723 = vrcp.pop %v702
        %v724 = vrcp.pop %v704
        %v725 = vrcp.pop %v706
        %v726 = vrcp.pop %v708
        %v727 = vrcp.pop %v710
        %v728 = vrcp.pop %v712
        %v729 = vmul.f32 %v650, %v713
        %v730 = vmul.f32 %v652, %v714
        %v731 = vmul.f32 %v654, %v715
        %v732 = vmul.f32 %v656, %v716
        %v733 = vmul.f32 %v658, %v717
        %v734 = vmul.f32 %v660, %v718
        %v735 = vmul.f32 %v662, %v719
        %v736 = vmul.f32 %v664, %v720
        %v737 = vmul.f32 %v666, %v721
        %v738 = vmul.f32 %v668, %v722
        %v739 = vmul.f32 %v670, %v723
        %v740 = vmul.f32 %v672, %v724
        %v741 = vmul.f32 %v674, %v725
        %v742 = vmul.f32 %v676, %v726
        %v743 = vmul.f32 %v678, %v727
        %v744 = vmul.f32 %v680, %v728
        %v745 = vmul.f32 %v585, %v729
        %v746 = vmul.f32 %v586, %v730
        %v747 = vmul.f32 %v587, %v731
        %v748 = vmul.f32 %v588, %v732
        %v749 = vmul.f32 %v589, %v733
        %v750 = vmul.f32 %v590, %v734
        %v751 = vmul.f32 %v591, %v735
        %v752 = vmul.f32 %v592, %v736
        %v753 = vmul.f32 %v593, %v737
        %v754 = vmul.f32 %v594, %v738
        %v755 = vmul.f32 %v595, %v739
        %v756 = vmul.f32 %v596, %v740
        %v757 = vmul.f32 %v597, %v741
        %v758 = vmul.f32 %v598, %v742
        %v759 = vmul.f32 %v599, %v743
        %v760 = vmul.f32 %v600, %v744
        %v761 = vpack.c.bf16 %v746, %v745
        %v762 = vpack.c.bf16 %v748, %v747
        %v763 = vpack.c.bf16 %v750, %v749
        %v764 = vpack.c.bf16 %v752, %v751
        %v765 = vpack.c.bf16 %v754, %v753
        %v766 = vpack.c.bf16 %v756, %v755
        %v767 = vpack.c.bf16 %v758, %v757
        %v768 = vpack.c.bf16 %v760, %v759
        %v769 = vld [vmem:[%s3] sm:$0xf]
        %v770 = vld [vmem:[%s3 + $0x4] sm:$0xf]
        %v771 = vld [vmem:[%s3 + $0x8] sm:$0xf]
        %v772 = vld [vmem:[%s3 + $0xc] sm:$0xf]
        %v773 = vld [vmem:[%s3 + $0x10] sm:$0xf]
        %v774 = vld [vmem:[%s3 + $0x14] sm:$0xf]
        %v775 = vld [vmem:[%s3 + $0x18] sm:$0xf]
        %v776 = vld [vmem:[%s3 + $0x1c] sm:$0xf]
        %v777 = vld [vmem:[%s3 + $0x20] sm:$0xf]
        %v778 = vld [vmem:[%s3 + $0x24] sm:$0xf]
        %v779 = vld [vmem:[%s3 + $0x28] sm:$0xf]
        %v780 = vld [vmem:[%s3 + $0x2c] sm:$0xf]
        %v781 = vld [vmem:[%s3 + $0x30] sm:$0xf]
        %v782 = vld [vmem:[%s3 + $0x34] sm:$0xf]
        %v783 = vld [vmem:[%s3 + $0x38] sm:$0xf]
        %v784 = vld [vmem:[%s3 + $0x3c] sm:$0xf]
        %v785 = vld [vmem:[%s4] sm:$0x1]
        %v787 = vlaneseq
        %v788 = vshrl.u32 %v787, 7
        %v789 = vsub.s32 0, %v788
        %v790 = vrot.slane %v785, %v789
        %v808 = vunpack.c.l.b16 %v769
        %v809 = vunpack.c.l.b16 %v770
        %v810 = vunpack.c.l.b16 %v771
        %v811 = vunpack.c.l.b16 %v772
        %v812 = vunpack.c.l.b16 %v773
        %v813 = vunpack.c.l.b16 %v774
        %v814 = vunpack.c.l.b16 %v775
        %v815 = vunpack.c.l.b16 %v776
        %v816 = vunpack.c.l.b16 %v777
        %v817 = vunpack.c.l.b16 %v778
        %v818 = vunpack.c.l.b16 %v779
        %v819 = vunpack.c.l.b16 %v780
        %v820 = vunpack.c.l.b16 %v781
        %v821 = vunpack.c.l.b16 %v782
        %v822 = vunpack.c.l.b16 %v783
        %v823 = vunpack.c.l.b16 %v784
        %v824 = vpack.c.b16 %v809, %v808
        %v825 = vpack.c.b16 %v811, %v810
        %v826 = vpack.c.b16 %v813, %v812
        %v827 = vpack.c.b16 %v815, %v814
        %v828 = vpack.c.b16 %v817, %v816
        %v829 = vpack.c.b16 %v819, %v818
        %v830 = vpack.c.b16 %v821, %v820
        %v831 = vpack.c.b16 %v823, %v822
        %840 = vmatprep.subr.bf16.mxu0 0
        %841 = vmatpush1.bf16.msra.mxu0 %v824
        %842 = vmatprep.subr.bf16.mxu0 0
        %843 = vmatpush1.bf16.msra.mxu0 %v825
        %844 = vmatprep.subr.bf16.mxu0 0
        %845 = vmatpush1.bf16.msra.mxu0 %v826
        %846 = vmatprep.subr.bf16.mxu0 0
        %847 = vmatpush1.bf16.msra.mxu0 %v827
        %848 = vmatprep.subr.bf16.mxu0 0
        %849 = vmatpush1.bf16.msra.mxu0 %v828
        %850 = vmatprep.subr.bf16.mxu0 0
        %851 = vmatpush1.bf16.msra.mxu0 %v829
        %852 = vmatprep.subr.bf16.mxu0 0
        %853 = vmatpush1.bf16.msra.mxu0 %v830
        %854 = vmatprep.subr.bf16.mxu0 0
        %855 = vmatpush1.bf16.msra.mxu0 %v831
        %856 = vmatprep.subr.bf16.mxu0 0
        %857 = vmatpush1.bf16.msra.mxu0 0
        %858 = vmatprep.subr.bf16.mxu0 0
        %859 = vmatpush1.bf16.msra.mxu0 0
        %860 = vmatprep.subr.bf16.mxu0 0
        %861 = vmatpush1.bf16.msra.mxu0 0
        %862 = vmatprep.subr.bf16.mxu0 0
        %863 = vmatpush1.bf16.msra.mxu0 0
        %864 = vmatprep.subr.bf16.mxu0 0
        %865 = vmatpush1.bf16.msra.mxu0 0
        %866 = vmatprep.subr.bf16.mxu0 0
        %867 = vmatpush1.bf16.msra.mxu0 0
        %868 = vmatprep.subr.bf16.mxu0 0
        %869 = vmatpush1.bf16.msra.mxu0 0
        %870 = vmatprep.subr.bf16.mxu0 0
        %871 = vmatpush1.bf16.msra.mxu0 0
        %872 = vmatprep.mubr.bf16.mxu0 0
        %873 = vmatmul.mubr.bf16.gmra.mrb[0].mxu0 %v761
        %v874 = vpop.f32.mrb[0].mxu0
        %v875 = vadd.f32 %v790, %v874
        %v876 = vpop.f32.mrb[0].mxu0
        %v877 = vpop.f32.mrb[0].mxu0
        %v878 = vadd.f32 %v790, %v877
        %v879 = vpop.f32.mrb[0].mxu0
        %880 = vmatprep.mubr.bf16.mxu0 0
        %881 = vmatmul.mubr.bf16.gmra.mrb[0].mxu0 %v762
        %v882 = vpop.f32.mrb[0].mxu0
        %v883 = vadd.f32 %v790, %v882
        %v884 = vpop.f32.mrb[0].mxu0
        %v885 = vpop.f32.mrb[0].mxu0
        %v886 = vadd.f32 %v790, %v885
        %v887 = vpop.f32.mrb[0].mxu0
        %888 = vmatprep.mubr.bf16.mxu0 0
        %889 = vmatmul.mubr.bf16.gmra.mrb[0].mxu0 %v763
        %v890 = vpop.f32.mrb[0].mxu0
        %v891 = vadd.f32 %v790, %v890
        %v892 = vpop.f32.mrb[0].mxu0
        %v893 = vpop.f32.mrb[0].mxu0
        %v894 = vadd.f32 %v790, %v893
        %v895 = vpop.f32.mrb[0].mxu0
        %896 = vmatprep.mubr.bf16.mxu0 0
        %897 = vmatmul.mubr.bf16.gmra.mrb[0].mxu0 %v764
        %v898 = vpop.f32.mrb[0].mxu0
        %v899 = vadd.f32 %v790, %v898
        %v900 = vpop.f32.mrb[0].mxu0
        %v901 = vpop.f32.mrb[0].mxu0
        %v902 = vadd.f32 %v790, %v901
        %v903 = vpop.f32.mrb[0].mxu0
        %904 = vmatprep.mubr.bf16.mxu0 0
        %905 = vmatmul.mubr.bf16.gmra.mrb[0].mxu0 %v765
        %v906 = vpop.f32.mrb[0].mxu0
        %v907 = vadd.f32 %v790, %v906
        %v908 = vpop.f32.mrb[0].mxu0
        %v909 = vpop.f32.mrb[0].mxu0
        %v910 = vadd.f32 %v790, %v909
        %v911 = vpop.f32.mrb[0].mxu0
        %912 = vmatprep.mubr.bf16.mxu0 0
        %913 = vmatmul.mubr.bf16.gmra.mrb[0].mxu0 %v766
        %v914 = vpop.f32.mrb[0].mxu0
        %v915 = vadd.f32 %v790, %v914
        %v916 = vpop.f32.mrb[0].mxu0
        %v917 = vpop.f32.mrb[0].mxu0
        %v918 = vadd.f32 %v790, %v917
        %v919 = vpop.f32.mrb[0].mxu0
        %920 = vmatprep.mubr.bf16.mxu0 0
        %921 = vmatmul.mubr.bf16.gmra.mrb[0].mxu0 %v767
        %v922 = vpop.f32.mrb[0].mxu0
        %v923 = vadd.f32 %v790, %v922
        %v924 = vpop.f32.mrb[0].mxu0
        %v925 = vpop.f32.mrb[0].mxu0
        %v926 = vadd.f32 %v790, %v925
        %v927 = vpop.f32.mrb[0].mxu0
        %928 = vmatprep.mubr.bf16.mxu0 0
        %929 = vmatmul.mubr.bf16.gmra.mrb[0].mxu0 %v768
        %v930 = vpop.f32.mrb[0].mxu0
        %v931 = vadd.f32 %v790, %v930
        %v932 = vpop.f32.mrb[0].mxu0
        %v933 = vpop.f32.mrb[0].mxu0
        %v934 = vadd.f32 %v790, %v933
        %v935 = vpop.f32.mrb[0].mxu0
        %936 = vdwg.mxu0
        %vm937 = vcmp.ge.f32.partialorder %v875, 0.0
        %vm938 = vcmp.ge.f32.partialorder %v878, 0.0
        %vm939 = vcmp.ge.f32.partialorder %v883, 0.0
        %vm940 = vcmp.ge.f32.partialorder %v886, 0.0
        %vm941 = vcmp.ge.f32.partialorder %v891, 0.0
        %vm942 = vcmp.ge.f32.partialorder %v894, 0.0
        %vm943 = vcmp.ge.f32.partialorder %v899, 0.0
        %vm944 = vcmp.ge.f32.partialorder %v902, 0.0
        %vm945 = vcmp.ge.f32.partialorder %v907, 0.0
        %vm946 = vcmp.ge.f32.partialorder %v910, 0.0
        %vm947 = vcmp.ge.f32.partialorder %v915, 0.0
        %vm948 = vcmp.ge.f32.partialorder %v918, 0.0
        %vm949 = vcmp.ge.f32.partialorder %v923, 0.0
        %vm950 = vcmp.ge.f32.partialorder %v926, 0.0
        %vm951 = vcmp.ge.f32.partialorder %v931, 0.0
        %vm952 = vcmp.ge.f32.partialorder %v934, 0.0
        %v953 = vmul.f32 %v875, 0.01
        %v954 = vmul.f32 %v878, 0.01
        %v955 = vmul.f32 %v883, 0.01
        %v956 = vmul.f32 %v886, 0.01
        %v957 = vmul.f32 %v891, 0.01
        %v958 = vmul.f32 %v894, 0.01
        %v959 = vmul.f32 %v899, 0.01
        %v960 = vmul.f32 %v902, 0.01
        %v961 = vmul.f32 %v907, 0.01
        %v962 = vmul.f32 %v910, 0.01
        %v963 = vmul.f32 %v915, 0.01
        %v964 = vmul.f32 %v918, 0.01
        %v965 = vmul.f32 %v923, 0.01
        %v966 = vmul.f32 %v926, 0.01
        %v967 = vmul.f32 %v931, 0.01
        %v968 = vmul.f32 %v934, 0.01
        %v969 = vsel %vm937, %v875, %v953
        %v970 = vsel %vm938, %v878, %v954
        %v971 = vsel %vm939, %v883, %v955
        %v972 = vsel %vm940, %v886, %v956
        %v973 = vsel %vm941, %v891, %v957
        %v974 = vsel %vm942, %v894, %v958
        %v975 = vsel %vm943, %v899, %v959
        %v976 = vsel %vm944, %v902, %v960
        %v977 = vsel %vm945, %v907, %v961
        %v978 = vsel %vm946, %v910, %v962
        %v979 = vsel %vm947, %v915, %v963
        %v980 = vsel %vm948, %v918, %v964
        %v981 = vsel %vm949, %v923, %v965
        %v982 = vsel %vm950, %v926, %v966
        %v983 = vsel %vm951, %v931, %v967
        %v984 = vsel %vm952, %v934, %v968
        %v985 = vpack.c.bf16 %v970, %v969
        %v986 = vpack.c.bf16 %v972, %v971
        %v987 = vpack.c.bf16 %v974, %v973
        %v988 = vpack.c.bf16 %v976, %v975
        %v989 = vpack.c.bf16 %v978, %v977
        %v990 = vpack.c.bf16 %v980, %v979
        %v991 = vpack.c.bf16 %v982, %v981
        %v992 = vpack.c.bf16 %v984, %v983
        %v993 = vld [vmem:[%s5] sm:$0xf]
        %v994 = vld [vmem:[%s5 + $0x4] sm:$0xf]
        %v995 = vld [vmem:[%s5 + $0x8] sm:$0xf]
        %v996 = vld [vmem:[%s5 + $0xc] sm:$0xf]
        %v997 = vld [vmem:[%s5 + $0x10] sm:$0xf]
        %v998 = vld [vmem:[%s5 + $0x14] sm:$0xf]
        %v999 = vld [vmem:[%s5 + $0x18] sm:$0xf]
        %v1000 = vld [vmem:[%s5 + $0x1c] sm:$0xf]
        %v1001 = vld [vmem:[%s5 + $0x20] sm:$0xf]
        %v1002 = vld [vmem:[%s5 + $0x24] sm:$0xf]
        %v1003 = vld [vmem:[%s5 + $0x28] sm:$0xf]
        %v1004 = vld [vmem:[%s5 + $0x2c] sm:$0xf]
        %v1005 = vld [vmem:[%s5 + $0x30] sm:$0xf]
        %v1006 = vld [vmem:[%s5 + $0x34] sm:$0xf]
        %v1007 = vld [vmem:[%s5 + $0x38] sm:$0xf]
        %v1008 = vld [vmem:[%s5 + $0x3c] sm:$0xf]
        %v1009 = vld [vmem:[%s6] sm:$0x1]
        %v1011 = vlaneseq
        %v1012 = vshrl.u32 %v1011, 7
        %v1013 = vsub.s32 0, %v1012
        %v1014 = vrot.slane %v1009, %v1013
        %v1032 = vunpack.c.l.b16 %v993
        %v1033 = vunpack.c.l.b16 %v994
        %v1034 = vunpack.c.l.b16 %v995
        %v1035 = vunpack.c.l.b16 %v996
        %v1036 = vunpack.c.l.b16 %v997
        %v1037 = vunpack.c.l.b16 %v998
        %v1038 = vunpack.c.l.b16 %v999
        %v1039 = vunpack.c.l.b16 %v1000
        %v1040 = vunpack.c.l.b16 %v1001
        %v1041 = vunpack.c.l.b16 %v1002
        %v1042 = vunpack.c.l.b16 %v1003
        %v1043 = vunpack.c.l.b16 %v1004
        %v1044 = vunpack.c.l.b16 %v1005
        %v1045 = vunpack.c.l.b16 %v1006
        %v1046 = vunpack.c.l.b16 %v1007
        %v1047 = vunpack.c.l.b16 %v1008
        %v1048 = vpack.c.b16 %v1033, %v1032
        %v1049 = vpack.c.b16 %v1035, %v1034
        %v1050 = vpack.c.b16 %v1037, %v1036
        %v1051 = vpack.c.b16 %v1039, %v1038
        %v1052 = vpack.c.b16 %v1041, %v1040
        %v1053 = vpack.c.b16 %v1043, %v1042
        %v1054 = vpack.c.b16 %v1045, %v1044
        %v1055 = vpack.c.b16 %v1047, %v1046
        %1064 = vmatprep.subr.bf16.mxu0 0
        %1065 = vmatpush1.bf16.msra.mxu0 %v1048
        %1066 = vmatprep.subr.bf16.mxu0 0
        %1067 = vmatpush1.bf16.msra.mxu0 %v1049
        %1068 = vmatprep.subr.bf16.mxu0 0
        %1069 = vmatpush1.bf16.msra.mxu0 %v1050
        %1070 = vmatprep.subr.bf16.mxu0 0
        %1071 = vmatpush1.bf16.msra.mxu0 %v1051
        %1072 = vmatprep.subr.bf16.mxu0 0
        %1073 = vmatpush1.bf16.msra.mxu0 %v1052
        %1074 = vmatprep.subr.bf16.mxu0 0
        %1075 = vmatpush1.bf16.msra.mxu0 %v1053
        %1076 = vmatprep.subr.bf16.mxu0 0
        %1077 = vmatpush1.bf16.msra.mxu0 %v1054
        %1078 = vmatprep.subr.bf16.mxu0 0
        %1079 = vmatpush1.bf16.msra.mxu0 %v1055
        %1080 = vmatprep.subr.bf16.mxu0 0
        %1081 = vmatpush1.bf16.msra.mxu0 0
        %1082 = vmatprep.subr.bf16.mxu0 0
        %1083 = vmatpush1.bf16.msra.mxu0 0
        %1084 = vmatprep.subr.bf16.mxu0 0
        %1085 = vmatpush1.bf16.msra.mxu0 0
        %1086 = vmatprep.subr.bf16.mxu0 0
        %1087 = vmatpush1.bf16.msra.mxu0 0
        %1088 = vmatprep.subr.bf16.mxu0 0
        %1089 = vmatpush1.bf16.msra.mxu0 0
        %1090 = vmatprep.subr.bf16.mxu0 0
        %1091 = vmatpush1.bf16.msra.mxu0 0
        %1092 = vmatprep.subr.bf16.mxu0 0
        %1093 = vmatpush1.bf16.msra.mxu0 0
        %1094 = vmatprep.subr.bf16.mxu0 0
        %1095 = vmatpush1.bf16.msra.mxu0 0
        %1096 = vmatprep.mubr.bf16.mxu0 0
        %1097 = vmatmul.mubr.bf16.gmra.mrb[0].mxu0 %v985
        %v1098 = vpop.f32.mrb[0].mxu0
        %v1099 = vadd.f32 %v1014, %v1098
        %v1100 = vpop.f32.mrb[0].mxu0
        %v1101 = vpop.f32.mrb[0].mxu0
        %v1102 = vadd.f32 %v1014, %v1101
        %v1103 = vpop.f32.mrb[0].mxu0
        %1104 = vmatprep.mubr.bf16.mxu0 0
        %1105 = vmatmul.mubr.bf16.gmra.mrb[0].mxu0 %v986
        %v1106 = vpop.f32.mrb[0].mxu0
        %v1107 = vadd.f32 %v1014, %v1106
        %v1108 = vpop.f32.mrb[0].mxu0
        %v1109 = vpop.f32.mrb[0].mxu0
        %v1110 = vadd.f32 %v1014, %v1109
        %v1111 = vpop.f32.mrb[0].mxu0
        %1112 = vmatprep.mubr.bf16.mxu0 0
        %1113 = vmatmul.mubr.bf16.gmra.mrb[0].mxu0 %v987
        %v1114 = vpop.f32.mrb[0].mxu0
        %v1115 = vadd.f32 %v1014, %v1114
        %v1116 = vpop.f32.mrb[0].mxu0
        %v1117 = vpop.f32.mrb[0].mxu0
        %v1118 = vadd.f32 %v1014, %v1117
        %v1119 = vpop.f32.mrb[0].mxu0
        %1120 = vmatprep.mubr.bf16.mxu0 0
        %1121 = vmatmul.mubr.bf16.gmra.mrb[0].mxu0 %v988
        %v1122 = vpop.f32.mrb[0].mxu0
        %v1123 = vadd.f32 %v1014, %v1122
        %v1124 = vpop.f32.mrb[0].mxu0
        %v1125 = vpop.f32.mrb[0].mxu0
        %v1126 = vadd.f32 %v1014, %v1125
        %v1127 = vpop.f32.mrb[0].mxu0
        %1128 = vmatprep.mubr.bf16.mxu0 0
        %1129 = vmatmul.mubr.bf16.gmra.mrb[0].mxu0 %v989
        %v1130 = vpop.f32.mrb[0].mxu0
        %v1131 = vadd.f32 %v1014, %v1130
        %v1132 = vpop.f32.mrb[0].mxu0
        %v1133 = vpop.f32.mrb[0].mxu0
        %v1134 = vadd.f32 %v1014, %v1133
        %v1135 = vpop.f32.mrb[0].mxu0
        %1136 = vmatprep.mubr.bf16.mxu0 0
        %1137 = vmatmul.mubr.bf16.gmra.mrb[0].mxu0 %v990
        %v1138 = vpop.f32.mrb[0].mxu0
        %v1139 = vadd.f32 %v1014, %v1138
        %v1140 = vpop.f32.mrb[0].mxu0
        %v1141 = vpop.f32.mrb[0].mxu0
        %v1142 = vadd.f32 %v1014, %v1141
        %v1143 = vpop.f32.mrb[0].mxu0
        %1144 = vmatprep.mubr.bf16.mxu0 0
        %1145 = vmatmul.mubr.bf16.gmra.mrb[0].mxu0 %v991
        %v1146 = vpop.f32.mrb[0].mxu0
        %v1147 = vadd.f32 %v1014, %v1146
        %v1148 = vpop.f32.mrb[0].mxu0
        %v1149 = vpop.f32.mrb[0].mxu0
        %v1150 = vadd.f32 %v1014, %v1149
        %v1151 = vpop.f32.mrb[0].mxu0
        %1152 = vmatprep.mubr.bf16.mxu0 0
        %1153 = vmatmul.mubr.bf16.gmra.mrb[0].mxu0 %v992
        %v1154 = vpop.f32.mrb[0].mxu0
        %v1155 = vadd.f32 %v1014, %v1154
        %v1156 = vpop.f32.mrb[0].mxu0
        %v1157 = vpop.f32.mrb[0].mxu0
        %v1158 = vadd.f32 %v1014, %v1157
        %v1159 = vpop.f32.mrb[0].mxu0
        %1160 = vdwg.mxu0
        %vm1161 = vcmask 261120
        %1162 = vst.msk [vmem:[%s308] sm:$0xff] %vm1161, %v1099
        %1163 = vst.msk [vmem:[%s308 + $0x8] sm:$0xff] %vm1161, %v1102
        %1164 = vst.msk [vmem:[%s308 + $0x10] sm:$0xff] %vm1161, %v1107
        %1165 = vst.msk [vmem:[%s308 + $0x18] sm:$0xff] %vm1161, %v1110
        %1166 = vst.msk [vmem:[%s308 + $0x20] sm:$0xff] %vm1161, %v1115
        %1167 = vst.msk [vmem:[%s308 + $0x28] sm:$0xff] %vm1161, %v1118
        %1168 = vst.msk [vmem:[%s308 + $0x30] sm:$0xff] %vm1161, %v1123
        %1169 = vst.msk [vmem:[%s308 + $0x38] sm:$0xff] %vm1161, %v1126
        %1170 = vst.msk [vmem:[%s308 + $0x40] sm:$0xff] %vm1161, %v1131
        %1171 = vst.msk [vmem:[%s308 + $0x48] sm:$0xff] %vm1161, %v1134
        %1172 = vst.msk [vmem:[%s308 + $0x50] sm:$0xff] %vm1161, %v1139
        %1173 = vst.msk [vmem:[%s308 + $0x58] sm:$0xff] %vm1161, %v1142
        %1174 = vst.msk [vmem:[%s308 + $0x60] sm:$0xff] %vm1161, %v1147
        %1175 = vst.msk [vmem:[%s308 + $0x68] sm:$0xff] %vm1161, %v1150
        %1176 = vst.msk [vmem:[%s308 + $0x70] sm:$0xff] %vm1161, %v1155
        %1177 = vst.msk [vmem:[%s308 + $0x78] sm:$0xff] %vm1161, %v1158
        %s1178 = sand.u32 %s201, 1
        %s1179 = sand.u32 %s201, 1
        %s1180 = smul.addr %s1179, 128
        %s1181 = scalar_lea.vmem [#allocation3], %s1180
        // Predicated region
        $region53: #{tpu_custom_call.1} parent=51 // pred_check
          %p1182 = pneg %p211
        $region54: #{tpu_custom_call.1} parent=51 // pred_check_branch
          %1184 = sbr.rel (%p1182) target = $region56
        $region55: #{tpu_custom_call.1} parent=51 // pred_region
          %s1185 = smul.u32 16, %s20
          %s1186 = ssub.s32 25, %s1185
          %p1187 = scmp.lt.s32.totalorder %s1186, 16
          %s1188 = scalar_select %p1187, %s1186, 16
          %s1189 = smul.u32 128, %s1188
          %p1190 = scmp.ne.s32.totalorder 0, %s1189
          %s1191 = smul.addr %s1185, 8
          %s1192 = scalar_lea.vmem %s8, %s1191
          // Predicated region
          $region57: #{tpu_custom_call.1} parent=55 // pred_check
            %p1193 = pneg %p1190
          $region58: #{tpu_custom_call.1} parent=55 // pred_check_branch
            %1195 = sbr.rel (%p1193) target = $region60
          $region59: #{tpu_custom_call.1} parent=55 // pred_region
            // Predicated region
            $region61: #{tpu_custom_call.1} parent=59 // pred_check
              _
            $region62: #{tpu_custom_call.1} parent=59 // pred_check_branch
              %1197 = sbr.rel (0) target = $region64
            $region63: #{tpu_custom_call.1} parent=59 // pred_region
              // Predicated region
              $region83: #{tpu_custom_call.1} parent=63 // pred_check
                _
              $region84: #{tpu_custom_call.1} parent=63 // pred_check_branch
                %1276 = sbr.rel (0) target = $region86
              $region85: #{tpu_custom_call.1} parent=63 // pred_region
                %s1277 = sshrl.u32 %s1188, 4
                // While loop
                $region87: #{tpu_custom_call.1} parent=85 // loop_pre_header
                  _
                $region88: #{tpu_custom_call.1} parent=85 // loop_header
                  %s1279 = sphi 0, %s1281
                  %p1280 = scmp.ge.s32.totalorder %s1279, %s1277
                  %s1284 = sphi 0, %s1321
                  %s1285 = sphi %s1181, %s1324
                  %s1286 = sphi %s1192, %s1325
                $region89: #{tpu_custom_call.1} parent=85 // loop_header_branch
                  %1283 = sbr.rel (%p1280) target = $region93
                $region90: #{tpu_custom_call.1} parent=85 // loop_body
                  %v1287 = vld [vmem:[%s1285] sm:$0xff]
                  %1288 = vst [vmem:[%s1286] sm:$0xff] %v1287
                  %v1289 = vld [vmem:[%s1285 + $0x8] sm:$0xff]
                  %1290 = vst [vmem:[%s1286 + $0x8] sm:$0xff] %v1289
                  %v1291 = vld [vmem:[%s1285 + $0x10] sm:$0xff]
                  %1292 = vst [vmem:[%s1286 + $0x10] sm:$0xff] %v1291
                  %v1293 = vld [vmem:[%s1285 + $0x18] sm:$0xff]
                  %1294 = vst [vmem:[%s1286 + $0x18] sm:$0xff] %v1293
                  %v1295 = vld [vmem:[%s1285 + $0x20] sm:$0xff]
                  %1296 = vst [vmem:[%s1286 + $0x20] sm:$0xff] %v1295
                  %v1297 = vld [vmem:[%s1285 + $0x28] sm:$0xff]
                  %1298 = vst [vmem:[%s1286 + $0x28] sm:$0xff] %v1297
                  %v1299 = vld [vmem:[%s1285 + $0x30] sm:$0xff]
                  %1300 = vst [vmem:[%s1286 + $0x30] sm:$0xff] %v1299
                  %v1301 = vld [vmem:[%s1285 + $0x38] sm:$0xff]
                  %1302 = vst [vmem:[%s1286 + $0x38] sm:$0xff] %v1301
                  %v1303 = vld [vmem:[%s1285 + $0x40] sm:$0xff]
                  %1304 = vst [vmem:[%s1286 + $0x40] sm:$0xff] %v1303
                  %v1305 = vld [vmem:[%s1285 + $0x48] sm:$0xff]
                  %1306 = vst [vmem:[%s1286 + $0x48] sm:$0xff] %v1305
                  %v1307 = vld [vmem:[%s1285 + $0x50] sm:$0xff]
                  %1308 = vst [vmem:[%s1286 + $0x50] sm:$0xff] %v1307
                  %v1309 = vld [vmem:[%s1285 + $0x58] sm:$0xff]
                  %1310 = vst [vmem:[%s1286 + $0x58] sm:$0xff] %v1309
                  %v1311 = vld [vmem:[%s1285 + $0x60] sm:$0xff]
                  %1312 = vst [vmem:[%s1286 + $0x60] sm:$0xff] %v1311
                  %v1313 = vld [vmem:[%s1285 + $0x68] sm:$0xff]
                  %1314 = vst [vmem:[%s1286 + $0x68] sm:$0xff] %v1313
                  %v1315 = vld [vmem:[%s1285 + $0x70] sm:$0xff]
                  %1316 = vst [vmem:[%s1286 + $0x70] sm:$0xff] %v1315
                  %v1317 = vld [vmem:[%s1285 + $0x78] sm:$0xff]
                  %1318 = vst [vmem:[%s1286 + $0x78] sm:$0xff] %v1317
                  %s1319 = sadd.s32 1, %s1284
                  %p1320 = scmp.ge.s32.totalorder %s1319, %s1277
                  %s1321 = scalar_select %p1320, 0, %s1319
                  %s1322 = smul.u32 %s1321, 128
                  %s1323 = smul.u32 %s1321, 128
                  %s1324 = scalar_lea.vmem %s1181, %s1322 [#allocation3]
                  %s1325 = scalar_lea.vmem %s1192, %s1323
                $region91: #{tpu_custom_call.1} parent=85 // loop_footer
                  %s1281 = sadd.s32 %s1279, 1
                $region92: #{tpu_custom_call.1} parent=85 // loop_footer_branch
                  %1278 = sbr.rel target = $region88
                $region93: #{tpu_custom_call.1} parent=85 // loop_exit
                  _
                %s1326 = sshrl.u32 %s1188, 4
                %s1327 = sand.u32 %s1188, 15
                %s1328 = smul.u32 %s1326, 16
                %s1329 = smul.u32 8, %s1328
                %s1330 = scalar_lea.vmem %s1181, %s1329 [#allocation3]
                %s1331 = smul.u32 8, %s1328
                %s1332 = scalar_lea.vmem %s1192, %s1331
                // While loop
                $region94: #{tpu_custom_call.1} parent=85 // loop_pre_header
                  _
                $region95: #{tpu_custom_call.1} parent=85 // loop_header
                  %s1334 = sphi 0, %s1336
                  %p1335 = scmp.ge.s32.totalorder %s1334, %s1327
                  %s1339 = sphi 0, %s1346
                  %s1340 = sphi %s1330, %s1349
                  %s1341 = sphi %s1332, %s1350
                $region96: #{tpu_custom_call.1} parent=85 // loop_header_branch
                  %1338 = sbr.rel (%p1335) target = $region100
                $region97: #{tpu_custom_call.1} parent=85 // loop_body
                  %v1342 = vld [vmem:[%s1340] sm:$0xff]
                  %1343 = vst [vmem:[%s1341] sm:$0xff] %v1342
                  %s1344 = sadd.s32 1, %s1339
                  %p1345 = scmp.ge.s32.totalorder %s1344, %s1327
                  %s1346 = scalar_select %p1345, 0, %s1344
                  %s1347 = smul.u32 %s1346, 8
                  %s1348 = smul.u32 %s1346, 8
                  %s1349 = scalar_lea.vmem %s1330, %s1347 [#allocation3]
                  %s1350 = scalar_lea.vmem %s1332, %s1348
                $region98: #{tpu_custom_call.1} parent=85 // loop_footer
                  %s1336 = sadd.s32 %s1334, 1
                $region99: #{tpu_custom_call.1} parent=85 // loop_footer_branch
                  %1333 = sbr.rel target = $region95
                $region100: #{tpu_custom_call.1} parent=85 // loop_exit
                  _
              $region86: #{tpu_custom_call.1} parent=63 // pred_fallthru
                _
              // Predicated region
              $region101: #{tpu_custom_call.1} parent=63 // pred_check
                _
              $region102: #{tpu_custom_call.1} parent=63 // pred_check_branch
                %1352 = sbr.rel target = $region104
              $region103: #{tpu_custom_call.1} parent=63 // pred_region
                _
              $region104: #{tpu_custom_call.1} parent=63 // pred_fallthru
                _
            $region64: #{tpu_custom_call.1} parent=59 // pred_fallthru
              _
            // Predicated region
            $region65: #{tpu_custom_call.1} parent=59 // pred_check
              _
            $region66: #{tpu_custom_call.1} parent=59 // pred_check_branch
              %1199 = sbr.rel target = $region68
            $region67: #{tpu_custom_call.1} parent=59 // pred_region
              %s1201 = sshrl.u32 %s1188, 4
              // While loop
              $region69: #{tpu_custom_call.1} parent=67 // loop_pre_header
                _
              $region70: #{tpu_custom_call.1} parent=67 // loop_header
                %s1203 = sphi 0, %s1205
                %p1204 = scmp.ge.s32.totalorder %s1203, %s1201
                %s1208 = sphi 0, %s1245
                %s1209 = sphi %s1181, %s1248
                %s1210 = sphi %s1192, %s1249
              $region71: #{tpu_custom_call.1} parent=67 // loop_header_branch
                %1207 = sbr.rel (%p1204) target = $region75
              $region72: #{tpu_custom_call.1} parent=67 // loop_body
                %v1211 = vld [vmem:[%s1209] sm:$0xff]
                %1212 = vst [vmem:[%s1210] sm:$0xff] %v1211
                %v1213 = vld [vmem:[%s1209 + $0x8] sm:$0xff]
                %1214 = vst [vmem:[%s1210 + $0x8] sm:$0xff] %v1213
                %v1215 = vld [vmem:[%s1209 + $0x10] sm:$0xff]
                %1216 = vst [vmem:[%s1210 + $0x10] sm:$0xff] %v1215
                %v1217 = vld [vmem:[%s1209 + $0x18] sm:$0xff]
                %1218 = vst [vmem:[%s1210 + $0x18] sm:$0xff] %v1217
                %v1219 = vld [vmem:[%s1209 + $0x20] sm:$0xff]
                %1220 = vst [vmem:[%s1210 + $0x20] sm:$0xff] %v1219
                %v1221 = vld [vmem:[%s1209 + $0x28] sm:$0xff]
                %1222 = vst [vmem:[%s1210 + $0x28] sm:$0xff] %v1221
                %v1223 = vld [vmem:[%s1209 + $0x30] sm:$0xff]
                %1224 = vst [vmem:[%s1210 + $0x30] sm:$0xff] %v1223
                %v1225 = vld [vmem:[%s1209 + $0x38] sm:$0xff]
                %1226 = vst [vmem:[%s1210 + $0x38] sm:$0xff] %v1225
                %v1227 = vld [vmem:[%s1209 + $0x40] sm:$0xff]
                %1228 = vst [vmem:[%s1210 + $0x40] sm:$0xff] %v1227
                %v1229 = vld [vmem:[%s1209 + $0x48] sm:$0xff]
                %1230 = vst [vmem:[%s1210 + $0x48] sm:$0xff] %v1229
                %v1231 = vld [vmem:[%s1209 + $0x50] sm:$0xff]
                %1232 = vst [vmem:[%s1210 + $0x50] sm:$0xff] %v1231
                %v1233 = vld [vmem:[%s1209 + $0x58] sm:$0xff]
                %1234 = vst [vmem:[%s1210 + $0x58] sm:$0xff] %v1233
                %v1235 = vld [vmem:[%s1209 + $0x60] sm:$0xff]
                %1236 = vst [vmem:[%s1210 + $0x60] sm:$0xff] %v1235
                %v1237 = vld [vmem:[%s1209 + $0x68] sm:$0xff]
                %1238 = vst [vmem:[%s1210 + $0x68] sm:$0xff] %v1237
                %v1239 = vld [vmem:[%s1209 + $0x70] sm:$0xff]
                %1240 = vst [vmem:[%s1210 + $0x70] sm:$0xff] %v1239
                %v1241 = vld [vmem:[%s1209 + $0x78] sm:$0xff]
                %1242 = vst [vmem:[%s1210 + $0x78] sm:$0xff] %v1241
                %s1243 = sadd.s32 1, %s1208
                %p1244 = scmp.ge.s32.totalorder %s1243, %s1201
                %s1245 = scalar_select %p1244, 0, %s1243
                %s1246 = smul.u32 %s1245, 128
                %s1247 = smul.u32 %s1245, 128
                %s1248 = scalar_lea.vmem %s1181, %s1246 [#allocation3]
                %s1249 = scalar_lea.vmem %s1192, %s1247
              $region73: #{tpu_custom_call.1} parent=67 // loop_footer
                %s1205 = sadd.s32 %s1203, 1
              $region74: #{tpu_custom_call.1} parent=67 // loop_footer_branch
                %1202 = sbr.rel target = $region70
              $region75: #{tpu_custom_call.1} parent=67 // loop_exit
                _
              %s1250 = sshrl.u32 %s1188, 4
              %s1251 = sand.u32 %s1188, 15
              %s1252 = smul.u32 %s1250, 16
              %s1253 = smul.u32 8, %s1252
              %s1254 = scalar_lea.vmem %s1181, %s1253 [#allocation3]
              %s1255 = smul.u32 8, %s1252
              %s1256 = scalar_lea.vmem %s1192, %s1255
              // While loop
              $region76: #{tpu_custom_call.1} parent=67 // loop_pre_header
                _
              $region77: #{tpu_custom_call.1} parent=67 // loop_header
                %s1258 = sphi 0, %s1260
                %p1259 = scmp.ge.s32.totalorder %s1258, %s1251
                %s1263 = sphi 0, %s1270
                %s1264 = sphi %s1254, %s1273
                %s1265 = sphi %s1256, %s1274
              $region78: #{tpu_custom_call.1} parent=67 // loop_header_branch
                %1262 = sbr.rel (%p1259) target = $region82
              $region79: #{tpu_custom_call.1} parent=67 // loop_body
                %v1266 = vld [vmem:[%s1264] sm:$0xff]
                %1267 = vst [vmem:[%s1265] sm:$0xff] %v1266
                %s1268 = sadd.s32 1, %s1263
                %p1269 = scmp.ge.s32.totalorder %s1268, %s1251
                %s1270 = scalar_select %p1269, 0, %s1268
                %s1271 = smul.u32 %s1270, 8
                %s1272 = smul.u32 %s1270, 8
                %s1273 = scalar_lea.vmem %s1254, %s1271 [#allocation3]
                %s1274 = scalar_lea.vmem %s1256, %s1272
              $region80: #{tpu_custom_call.1} parent=67 // loop_footer
                %s1260 = sadd.s32 %s1258, 1
              $region81: #{tpu_custom_call.1} parent=67 // loop_footer_branch
                %1257 = sbr.rel target = $region77
              $region82: #{tpu_custom_call.1} parent=67 // loop_exit
                _
            $region68: #{tpu_custom_call.1} parent=59 // pred_fallthru
              _
          $region60: #{tpu_custom_call.1} parent=55 // pred_fallthru
            _
          %1353 = vnop
        $region56: #{tpu_custom_call.1} parent=51 // pred_fallthru
          _
      $region52: #{tpu_custom_call.1} parent=5 // pred_fallthru
        _
      %p1354 = scmp.le.s32.totalorder 2, %s15
      // Predicated region
      $region105: #{tpu_custom_call.1} parent=5 // pred_check
        %p1355 = pneg %p1354
      $region106: #{tpu_custom_call.1} parent=5 // pred_check_branch
        %1357 = sbr.rel (%p1355) target = $region108
      $region107: #{tpu_custom_call.1} parent=5 // pred_region
        %s1358 = ssub.s32 %s15, 2
        // Predicated region
        $region109: #{tpu_custom_call.1} parent=107 // pred_check
          %p1359 = pneg %p217
        $region110: #{tpu_custom_call.1} parent=107 // pred_check_branch
          %1361 = sbr.rel (%p1359) target = $region112
        $region111: #{tpu_custom_call.1} parent=107 // pred_region
          %s1362 = sand.u32 %s202, 1
          %s1363 = sand.u32 %s202, 1
          %s1364 = smul.addr %s1363, 128
          %s1365 = scalar_lea.vmem [#allocation3], %s1364
        $region112: #{tpu_custom_call.1} parent=107 // pred_fallthru
          _
      $region108: #{tpu_custom_call.1} parent=5 // pred_fallthru
        _
    $region6: #{tpu_custom_call.1} parent=1 // loop_footer
      %s19 = sadd.s32 1, %s15
    $region7: #{tpu_custom_call.1} parent=1 // loop_footer_branch
      %14 = sbr.rel target = $region3
    $region8: #{tpu_custom_call.1} parent=1 // loop_exit
      _

</llo_original>
